<compile_context>
chip_gen: v6e
topology: v6e:2x2x1
jax: 0.10.0
libtpu: 0.0.40
codegen_flags: <defaults>
</compile_context>

<pallas_src>
import functools

import jax
import jax.numpy as jnp
from jax import lax
from jax.experimental import pallas as pl
from jax.experimental.pallas import tpu as pltpu


def pienet_kernel(out_ref, x_ref, w1_ref, w2_ref, fcw_ref, fcb_ref,
                  g_ref, beta_ref, fc1w_ref, fc1b_ref,
                  y_ref, attn_ref, res_ref, *, mxu_dtype):
    x_in = x_ref[...]                                   # (TB, L, D_in)  f32 or bf16
    x = x_in.astype(jnp.float32)                        # VPU math stays f32 (v5e-safe)
    out = out_ref[...].astype(jnp.float32)              # (TB, D_out)
    TB, L, D = x.shape
    DH = w1_ref.shape[-1]

    # --- MultiHeadSelfAttention (n_head = 1) ---
    # MXU operands in `mxu_dtype` (bf16 -> native 2x256^2 / 4x128^2 throughput),
    # accumulation in f32.
    w1 = w1_ref[...].astype(mxu_dtype)
    # Flattening (TB, L, D) -> (TB*L, D) is only layout-free when L lands on a sublane
    # tile boundary (8 rows for f32, 16 for packed bf16); otherwise keep the batched
    # einsum form to avoid materializing a VMEM copy of the x/h tile every grid step.
    sub = 8 if x_in.dtype == jnp.float32 else 16
    if L % sub == 0:
        x2d = x_in.reshape(TB * L, D).astype(mxu_dtype)
        h3 = jnp.tanh(jnp.dot(x2d, w1,
                              preferred_element_type=jnp.float32)).reshape(TB, L, DH)
    else:
        h3 = jnp.tanh(jnp.einsum('bld,dh->blh', x_in.astype(mxu_dtype), w1,
                                 preferred_element_type=jnp.float32))
    # NOTE: if a bundle dump shows the single EUP slot binding (large DH), tanh/exp can
    # be run in bf16 on v6e/v7x; kept f32 here for accuracy and v5e compatibility.

    # N=1 head projection: keep it off the MXU -- VPU multiply + lane reduction (f32).
    w2_row = w2_ref[...].astype(jnp.float32).reshape(1, 1, DH)
    logits = jnp.sum(h3 * w2_row, axis=-1)              # (TB, L)

    # Softmax over L (lane axis); approximate reciprocal runs on the otherwise-idle EUP.
    m = jnp.max(logits, axis=-1, keepdims=True)
    e = jnp.exp(logits - m)
    inv = pl.reciprocal(jnp.sum(e, axis=-1, keepdims=True), approx=True)
    attn = e * inv                                       # (TB, L)
    attn_ref[...] = attn.astype(attn_ref.dtype)          # lane-dense store

    # pooled[b, d] = sum_l attn[b, l] * x[b, l, d]
    # VPU broadcast-multiply + sublane reduce: a per-batch (1,L)@(L,D) matmul would use
    # <1% of the MXU rows and serialize TB tiny matmuls through the result FIFO/buffer.
    pooled = jnp.sum(attn[:, :, None] * x, axis=1)       # (TB, D)  f32

    # --- residual = dropout(sigmoid(fc(pooled)))  (p = 0 -> identity) ---
    res = jax.nn.sigmoid(
        jnp.dot(pooled.astype(mxu_dtype), fcw_ref[...].astype(mxu_dtype),
                preferred_element_type=jnp.float32)
        + fcb_ref[...].astype(jnp.float32))              # (TB, D_out)
    res_ref[...] = res.astype(res_ref.dtype)

    # --- layer_norm(out + residual)  (eps = 1e-5, biased variance, like PyTorch) ---
    # TODO(synk): num_embeds > 1 branch (fresh randn noise scaling of `out`), the
    # pad_mask masked_fill path, and dropout p > 0 are not implemented
    # (kernel assumes n_embeds = 1, mask = None, p = 0, d_in == d_out).
    y = out + res
    mu = jnp.mean(y, axis=-1, keepdims=True)
    var = jnp.mean((y - mu) ** 2, axis=-1, keepdims=True)
    yn = (y - mu) * lax.rsqrt(var + 1e-5)
    yn = yn * g_ref[...].astype(jnp.float32) + beta_ref[...].astype(jnp.float32)

    # --- fc1 ---
    y_ref[...] = (jnp.dot(yn.astype(mxu_dtype), fc1w_ref[...].astype(mxu_dtype),
                          preferred_element_type=jnp.float32)
                  + fc1b_ref[...].astype(jnp.float32)).astype(y_ref.dtype)


def _chip_defaults():
    """Per-generation (vmem_limit_bytes, min_grid_steps) defaults."""
    try:
        kind = jax.devices()[0].device_kind.lower()
    except Exception:
        kind = ""
    if "v7" in kind:
        # 64 MiB physical VMEM, 2 TensorCores: keep >= 2 grid steps, modest scoped VMEM.
        return 32 * 1024 * 1024, 2
    if "v5 lite" in kind or "v5e" in kind or "v6" in kind or "trillium" in kind:
        # 128 MiB physical VMEM, single TensorCore: grow the tile instead of the grid.
        return 96 * 1024 * 1024, 1
    if "v4" in kind or "v5" in kind:
        # v4 / v5p megacore: 128 MiB VMEM, 2 TCs share the parallel grid axis.
        return 96 * 1024 * 1024, 2
    # Unknown chip: conservative (v7x-safe).
    return 32 * 1024 * 1024, 2


def pienet_forward(out, x, params, *, tb=None, vmem_limit_bytes=None,
                   use_bf16_mxu=True, stream_x_bf16=False,
                   single_buffer_weights=False):
    """Fused PIENet forward.  Returns (y, attn, residual) like the PyTorch module."""
    B, L, d_in = x.shape
    d_out = params['fc1_w'].shape[-1]
    d_h = params['w1'].shape[-1]

    default_vmem, min_grid_steps = _chip_defaults()
    if vmem_limit_bytes is None:
        vmem_limit_bytes = default_vmem

    # Normalize rank-1 bias/scale params to (1, D) so in-kernel broadcasts are well-defined.
    p = dict(params)
    for k in ('fc_b', 'ln_g', 'ln_b', 'fc1_b'):
        if p[k].ndim == 1:
            p[k] = p[k].reshape(1, -1)
    if p['w2'].ndim == 1:
        p['w2'] = p['w2'].reshape(1, -1)              # PyTorch layout (n_head=1, d_h)

    out = out.astype(jnp.float32)
    x = x.astype(jnp.bfloat16 if stream_x_bf16 else jnp.float32)
    x_elem_bytes = x.dtype.itemsize

    weight_args = (p['w1'], p['w2'], p['fc_w'], p['fc_b'],
                   p['ln_g'], p['ln_b'], p['fc1_w'], p['fc1_b'])
    weight_bytes = sum(int(a.size) * a.dtype.itemsize for a in weight_args)

    # Batch tile: biggest that fits the scoped-VMEM budget.  Accounts for the streamed
    # (double-buffered) x/out/y/attn/res blocks AND the in-kernel intermediates (the f32
    # h slab plus the bf16 MXU-operand copies dominate at large d_h), minus the resident
    # weights and fixed headroom.  Capped so the batch grid has >= min_grid_steps steps
    # (keeps both TensorCores busy on v7x / megacore chips via the "parallel" axis).
    if tb is None:
        stream_row = 2 * (x_elem_bytes * L * d_in + 4 * (3 * d_out + L))
        interm_row = (4 * L * d_h                         # f32 h slab
                      + 2 * (L * d_in + L * d_h)          # bf16 MXU operand copies
                      + 4 * (2 * L + d_in + 4 * d_out))   # logits/e/pooled/y temporaries
        per_row = max(stream_row + interm_row, 1)
        budget = vmem_limit_bytes - 2 * weight_bytes - (4 << 20)
        tb = max(8, (max(budget, 0) // per_row) // 8 * 8)
        if min_grid_steps > 1 and B > 8:
            tb = min(tb, max(8, (pl.cdiv(B, min_grid_steps) // 8) * 8))
    tb = min(tb, B)
    assert tb == B or tb % 8 == 0, "batch tile must be a multiple of 8 (or cover B)"
    nb = pl.cdiv(B, tb)

    def tiled(shape):      # tile over the batch (first) axis
        return pl.BlockSpec(shape, lambda i: (i,) + (0,) * (len(shape) - 1))

    def resident(shape):   # weights/biases: same block every step -> stay VMEM-resident
        idx_map = lambda i: (0,) * len(shape)
        if single_buffer_weights:
            # v7x headroom: single VMEM copy instead of a double-buffered pair (the block
            # index is constant).  Guarded: older JAX releases reject pipeline_mode.
            try:
                return pl.BlockSpec(shape, idx_map, pipeline_mode=pl.Buffered(1))
            except TypeError:
                pass
        return pl.BlockSpec(shape, idx_map)

    args = (out, x) + weight_args
    in_specs = [tiled((tb, d_out)), tiled((tb, L, d_in))] + \
               [resident(a.shape) for a in weight_args]

    out_shapes = (jax.ShapeDtypeStruct((B, d_out), jnp.float32),   # final out
                  jax.ShapeDtypeStruct((B, L), jnp.float32),       # attn (lane-dense)
                  jax.ShapeDtypeStruct((B, d_out), jnp.float32))   # residual
    out_specs = (tiled((tb, d_out)), tiled((tb, L)), tiled((tb, d_out)))

    flops = int(2 * B * L * d_in * d_h + 2 * B * L * d_h + 2 * B * L * d_in
                + 2 * B * d_in * d_out + 2 * B * d_out * d_out + 10 * B * d_out)
    transcendentals = int(B * L * d_h + B * L + B * d_out + 2 * B)
    bytes_accessed = int(x.size * x_elem_bytes + weight_bytes
                         + 4 * (out.size + 2 * B * d_out + B * L))

    mxu_dtype = jnp.bfloat16 if use_bf16_mxu else jnp.float32
    kernel = functools.partial(pienet_kernel, mxu_dtype=mxu_dtype)

    y, attn, res = pl.pallas_call(
        kernel,
        grid=(nb,),
        in_specs=in_specs,
        out_specs=out_specs,
        out_shape=out_shapes,
        compiler_params=pltpu.CompilerParams(
            dimension_semantics=("parallel",),
            vmem_limit_bytes=vmem_limit_bytes),
        cost_estimate=pl.CostEstimate(flops=flops,
                                      transcendentals=transcendentals,
                                      bytes_accessed=bytes_accessed),
    )(*args)

    # Layout plumbing outside the kernel: the module returns attn as (B, L, n_head=1).
    return y, attn.reshape(B, L, 1), res


def xavier_uniform(key, fan_in, fan_out, shape):
    bound = (6.0 / (fan_in + fan_out)) ** 0.5
    return jax.random.uniform(key, shape, jnp.float32, -bound, bound)


def ref_forward(out, x, p):
    """Plain-JAX reference of the PyTorch forward (n_embeds=1, dropout=0, no mask)."""
    h = jnp.tanh(x @ p['w1'])                              # (B, L, d_h)
    logits = h @ p['w2'].T                                 # (B, L, 1); w2 is (1, d_h)
    attn = jax.nn.softmax(logits, axis=1)
    pooled = jnp.sum(attn * x, axis=1)
    res = jax.nn.sigmoid(pooled @ p['fc_w'] + p['fc_b'])
    y = out + res
    mu = y.mean(-1, keepdims=True)
    var = ((y - mu) ** 2).mean(-1, keepdims=True)
    yn = (y - mu) / jnp.sqrt(var + 1e-5) * p['ln_g'] + p['ln_b']
    return yn @ p['fc1_w'] + p['fc1_b'], attn, res


if __name__ == "__main__":
    B, L = 16, 8              # big enough to exercise a multi-step batch grid
    D_IN = D_OUT = 32         # fc1(d_in -> d_out) after layer_norm(d_out) => d_in == d_out
    D_H = 16
    N_EMBEDS = 1

    key = jax.random.PRNGKey(0)
    ks = jax.random.split(key, 8)

    x = jax.random.normal(ks[0], (B, L, D_IN), jnp.float32)
    out_in = jax.random.normal(ks[1], (B, D_OUT), jnp.float32)

    fc1_bound = 1.0 / (D_IN ** 0.5)
    params = {
        'w1':    xavier_uniform(ks[2], D_IN, D_H, (D_IN, D_H)),          # attention.w_1 (transposed)
        'w2':    xavier_uniform(ks[3], D_H, N_EMBEDS, (N_EMBEDS, D_H)),  # attention.w_2 (PyTorch layout)
        'fc_w':  xavier_uniform(ks[4], D_IN, D_OUT, (D_IN, D_OUT)),      # fc (transposed)
        'fc_b':  jnp.zeros((D_OUT,), jnp.float32),                       # fc bias init 0
        'ln_g':  jnp.ones((D_OUT,), jnp.float32),                        # LayerNorm gamma
        'ln_b':  jnp.zeros((D_OUT,), jnp.float32),                       # LayerNorm beta
        'fc1_w': jax.random.uniform(ks[5], (D_IN, D_OUT), jnp.float32,
                                    -fc1_bound, fc1_bound),              # fc1 (default-ish init)
        'fc1_b': jax.random.uniform(ks[6], (D_OUT,), jnp.float32,
                                    -fc1_bound, fc1_bound),
    }

    y_exp, attn_exp, res_exp = ref_forward(out_in, x, params)

    # f32-MXU path: near-exact vs the reference (only the approximate softmax
    # reciprocal differs, ~1e-4 relative).
    y32, attn32, res32 = pienet_forward(out_in, x, params, use_bf16_mxu=False)
    jax.block_until_ready((y32, attn32, res32))
    assert jnp.allclose(attn32, attn_exp, atol=5e-3, rtol=5e-3), "attn mismatch (f32)"
    assert jnp.allclose(res32, res_exp, atol=5e-3, rtol=5e-3), "residual mismatch (f32)"
    assert jnp.allclose(y32, y_exp, atol=5e-3, rtol=5e-3), "output mismatch (f32)"

    # Default perf path: bf16 MXU operands with f32 accumulation (looser tolerance).
    y, attn, res = pienet_forward(out_in, x, params)
    jax.block_until_ready((y, attn, res))
    assert jnp.allclose(attn, attn_exp, atol=2e-2, rtol=2e-2), "attn mismatch (bf16)"
    assert jnp.allclose(res, res_exp, atol=2e-2, rtol=2e-2), "residual mismatch (bf16)"
    assert jnp.allclose(y, y_exp, atol=2e-2, rtol=2e-2), "output mismatch (bf16)"

    print("KERNEL_OK")
</pallas_src>

<mosaic_0001>
module attributes {stable_mosaic.version = 11 : i64} {
  func.func @pienet_kernel(%arg0: i32, %arg1: memref<8x32xf32, #tpu.memory_space<vmem>>, %arg2: memref<8x8x32xf32, #tpu.memory_space<vmem>>, %arg3: memref<32x16xf32, #tpu.memory_space<vmem>>, %arg4: memref<1x16xf32, #tpu.memory_space<vmem>>, %arg5: memref<32x32xf32, #tpu.memory_space<vmem>>, %arg6: memref<1x32xf32, #tpu.memory_space<vmem>>, %arg7: memref<1x32xf32, #tpu.memory_space<vmem>>, %arg8: memref<1x32xf32, #tpu.memory_space<vmem>>, %arg9: memref<32x32xf32, #tpu.memory_space<vmem>>, %arg10: memref<1x32xf32, #tpu.memory_space<vmem>>, %arg11: memref<8x32xf32, #tpu.memory_space<vmem>>, %arg12: memref<8x8xf32, #tpu.memory_space<vmem>>, %arg13: memref<8x32xf32, #tpu.memory_space<vmem>>) attributes {dimension_semantics = [#tpu.dimension_semantics<parallel>], iteration_bounds = array<i64: 2>, scalar_prefetch = 0 : i64, scratch_operands = 0 : i64, tpu.core_type = #tpu.core_type<tc>, window_params = [{transform_indices = @transform_0, window_bounds = array<i64: 8, 32>}, {transform_indices = @transform_1, window_bounds = array<i64: 8, 8, 32>}, {pipeline_mode = #tpu.pipeline_mode<synchronous>, transform_indices = @transform_2, window_bounds = array<i64: 32, 16>}, {pipeline_mode = #tpu.pipeline_mode<synchronous>, transform_indices = @transform_3, window_bounds = array<i64: 1, 16>}, {pipeline_mode = #tpu.pipeline_mode<synchronous>, transform_indices = @transform_4, window_bounds = array<i64: 32, 32>}, {pipeline_mode = #tpu.pipeline_mode<synchronous>, transform_indices = @transform_5, window_bounds = array<i64: 1, 32>}, {pipeline_mode = #tpu.pipeline_mode<synchronous>, transform_indices = @transform_6, window_bounds = array<i64: 1, 32>}, {pipeline_mode = #tpu.pipeline_mode<synchronous>, transform_indices = @transform_7, window_bounds = array<i64: 1, 32>}, {pipeline_mode = #tpu.pipeline_mode<synchronous>, transform_indices = @transform_8, window_bounds = array<i64: 32, 32>}, {pipeline_mode = #tpu.pipeline_mode<synchronous>, transform_indices = @transform_9, window_bounds = array<i64: 1, 32>}, {transform_indices = @transform_10, window_bounds = array<i64: 8, 32>}, {transform_indices = @transform_11, window_bounds = array<i64: 8, 8>}, {transform_indices = @transform_12, window_bounds = array<i64: 8, 32>}]} {
    %c0 = arith.constant 0 : index
    %c0_0 = arith.constant 0 : index
    %c0_1 = arith.constant 0 : index
    %0 = vector.load %arg2[%c0, %c0_0, %c0_1] : memref<8x8x32xf32, #tpu.memory_space<vmem>>, vector<8x8x32xf32>
    %c0_2 = arith.constant 0 : index
    %c0_3 = arith.constant 0 : index
    %1 = vector.load %arg1[%c0_2, %c0_3] : memref<8x32xf32, #tpu.memory_space<vmem>>, vector<8x32xf32>
    %c0_4 = arith.constant 0 : index
    %c0_5 = arith.constant 0 : index
    %2 = vector.load %arg3[%c0_4, %c0_5] : memref<32x16xf32, #tpu.memory_space<vmem>>, vector<32x16xf32>
    %3 = vector.shape_cast %0 : vector<8x8x32xf32> to vector<64x32xf32>
    %cst = arith.constant dense<0.000000e+00> : vector<64x16xf32>
    %4 = tpu.matmul %3, %2, %cst {dimension_numbers = #tpu.dot_dimension_numbers<[1], [0], [0], [1], [0, 0, 1, 1], [], []>} : vector<64x32xf32>, vector<32x16xf32>, vector<64x16xf32> -> vector<64x16xf32>
    %5 = math.tanh %4 : vector<64x16xf32>
    %6 = vector.shape_cast %5 : vector<64x16xf32> to vector<8x8x16xf32>
    %c0_6 = arith.constant 0 : index
    %c0_7 = arith.constant 0 : index
    %7 = vector.load %arg4[%c0_6, %c0_7] : memref<1x16xf32, #tpu.memory_space<vmem>>, vector<1x16xf32>
    %8 = vector.shape_cast %7 : vector<1x16xf32> to vector<1x1x16xf32>
    %9 = vector.broadcast %8 : vector<1x1x16xf32> to vector<8x8x16xf32>
    %10 = arith.mulf %6, %9 : vector<8x8x16xf32>
    %cst_8 = arith.constant dense<0.000000e+00> : vector<8x8xf32>
    %11 = vector.multi_reduction <add>, %10, %cst_8 [2] : vector<8x8x16xf32> to vector<8x8xf32>
    %cst_9 = arith.constant dense<0xFF800000> : vector<8xf32>
    %12 = vector.multi_reduction <maximumf>, %11, %cst_9 [1] : vector<8x8xf32> to vector<8xf32>
    %13 = vector.shape_cast %12 : vector<8xf32> to vector<8x1xf32>
    %14 = vector.broadcast %13 : vector<8x1xf32> to vector<8x8xf32>
    %15 = arith.subf %11, %14 : vector<8x8xf32>
    %16 = math.exp %15 : vector<8x8xf32>
    %cst_10 = arith.constant dense<0.000000e+00> : vector<8xf32>
    %17 = vector.multi_reduction <add>, %16, %cst_10 [1] : vector<8x8xf32> to vector<8xf32>
    %18 = vector.shape_cast %17 : vector<8xf32> to vector<8x1xf32>
    %19 = tpu.reciprocal %18 {approx = true} : vector<8x1xf32> -> vector<8x1xf32>
    %20 = vector.broadcast %19 : vector<8x1xf32> to vector<8x8xf32>
    %21 = arith.mulf %16, %20 : vector<8x8xf32>
    %c0_11 = arith.constant 0 : index
    %c0_12 = arith.constant 0 : index
    %22 = vector.load %arg12[%c0_11, %c0_12] : memref<8x8xf32, #tpu.memory_space<vmem>>, vector<8x8xf32>
    tpu.vector_store %arg12[%c0_11, %c0_12], %21 {strides = array<i32>} : memref<8x8xf32, #tpu.memory_space<vmem>>, vector<8x8xf32>,
    %23 = vector.shape_cast %21 : vector<8x8xf32> to vector<8x8x1xf32>
    %24 = vector.broadcast %23 : vector<8x8x1xf32> to vector<8x8x32xf32>
    %25 = arith.mulf %24, %0 : vector<8x8x32xf32>
    %cst_13 = arith.constant dense<0.000000e+00> : vector<8x32xf32>
    %26 = vector.multi_reduction <add>, %25, %cst_13 [1] : vector<8x8x32xf32> to vector<8x32xf32>
    %c0_14 = arith.constant 0 : index
    %c0_15 = arith.constant 0 : index
    %27 = vector.load %arg5[%c0_14, %c0_15] : memref<32x32xf32, #tpu.memory_space<vmem>>, vector<32x32xf32>
    %cst_16 = arith.constant dense<0.000000e+00> : vector<8x32xf32>
    %28 = tpu.matmul %26, %27, %cst_16 {dimension_numbers = #tpu.dot_dimension_numbers<[1], [0], [0], [1], [0, 0, 1, 1], [], []>} : vector<8x32xf32>, vector<32x32xf32>, vector<8x32xf32> -> vector<8x32xf32>
    %c0_17 = arith.constant 0 : index
    %c0_18 = arith.constant 0 : index
    %29 = vector.load %arg6[%c0_17, %c0_18] : memref<1x32xf32, #tpu.memory_space<vmem>>, vector<1x32xf32>
    %30 = vector.broadcast %29 : vector<1x32xf32> to vector<8x32xf32>
    %31 = arith.addf %28, %30 : vector<8x32xf32>
    %32 = arith.negf %31 : vector<8x32xf32>
    %33 = math.exp %32 : vector<8x32xf32>
    %cst_19 = arith.constant 1.000000e+00 : f32
    %34 = vector.broadcast %cst_19 : f32 to vector<8x32xf32>
    %35 = arith.addf %34, %33 : vector<8x32xf32>
    %36 = arith.divf %34, %35 : vector<8x32xf32>
    %c0_20 = arith.constant 0 : index
    %c0_21 = arith.constant 0 : index
    %37 = vector.load %arg13[%c0_20, %c0_21] : memref<8x32xf32, #tpu.memory_space<vmem>>, vector<8x32xf32>
    tpu.vector_store %arg13[%c0_20, %c0_21], %36 {strides = array<i32>} : memref<8x32xf32, #tpu.memory_space<vmem>>, vector<8x32xf32>,
    %38 = arith.addf %1, %36 : vector<8x32xf32>
    %cst_22 = arith.constant dense<0.000000e+00> : vector<8xf32>
    %39 = vector.multi_reduction <add>, %38, %cst_22 [1] : vector<8x32xf32> to vector<8xf32>
    %40 = vector.shape_cast %39 : vector<8xf32> to vector<8x1xf32>
    %cst_23 = arith.constant 3.200000e+01 : f32
    %41 = vector.broadcast %cst_23 : f32 to vector<8x1xf32>
    %42 = arith.divf %40, %41 : vector<8x1xf32>
    %43 = vector.broadcast %42 : vector<8x1xf32> to vector<8x32xf32>
    %44 = arith.subf %38, %43 : vector<8x32xf32>
    %45 = arith.mulf %44, %44 : vector<8x32xf32>
    %cst_24 = arith.constant dense<0.000000e+00> : vector<8xf32>
    %46 = vector.multi_reduction <add>, %45, %cst_24 [1] : vector<8x32xf32> to vector<8xf32>
    %47 = vector.shape_cast %46 : vector<8xf32> to vector<8x1xf32>
    %cst_25 = arith.constant 3.200000e+01 : f32
    %48 = vector.broadcast %cst_25 : f32 to vector<8x1xf32>
    %49 = arith.divf %47, %48 : vector<8x1xf32>
    %50 = vector.broadcast %42 : vector<8x1xf32> to vector<8x32xf32>
    %51 = arith.subf %38, %50 : vector<8x32xf32>
    %cst_26 = arith.constant 9.99999974E-6 : f32
    %52 = vector.broadcast %cst_26 : f32 to vector<8x1xf32>
    %53 = arith.addf %49, %52 : vector<8x1xf32>
    %54 = math.rsqrt %53 : vector<8x1xf32>
    %55 = vector.broadcast %54 : vector<8x1xf32> to vector<8x32xf32>
    %56 = arith.mulf %51, %55 : vector<8x32xf32>
    %c0_27 = arith.constant 0 : index
    %c0_28 = arith.constant 0 : index
    %57 = vector.load %arg7[%c0_27, %c0_28] : memref<1x32xf32, #tpu.memory_space<vmem>>, vector<1x32xf32>
    %58 = vector.broadcast %57 : vector<1x32xf32> to vector<8x32xf32>
    %59 = arith.mulf %56, %58 : vector<8x32xf32>
    %c0_29 = arith.constant 0 : index
    %c0_30 = arith.constant 0 : index
    %60 = vector.load %arg8[%c0_29, %c0_30] : memref<1x32xf32, #tpu.memory_space<vmem>>, vector<1x32xf32>
    %61 = vector.broadcast %60 : vector<1x32xf32> to vector<8x32xf32>
    %62 = arith.addf %59, %61 : vector<8x32xf32>
    %c0_31 = arith.constant 0 : index
    %c0_32 = arith.constant 0 : index
    %63 = vector.load %arg9[%c0_31, %c0_32] : memref<32x32xf32, #tpu.memory_space<vmem>>, vector<32x32xf32>
    %cst_33 = arith.constant dense<0.000000e+00> : vector<8x32xf32>
    %64 = tpu.matmul %62, %63, %cst_33 {dimension_numbers = #tpu.dot_dimension_numbers<[1], [0], [0], [1], [0, 0, 1, 1], [], []>} : vector<8x32xf32>, vector<32x32xf32>, vector<8x32xf32> -> vector<8x32xf32>
    %c0_34 = arith.constant 0 : index
    %c0_35 = arith.constant 0 : index
    %65 = vector.load %arg10[%c0_34, %c0_35] : memref<1x32xf32, #tpu.memory_space<vmem>>, vector<1x32xf32>
    %66 = vector.broadcast %65 : vector<1x32xf32> to vector<8x32xf32>
    %67 = arith.addf %64, %66 : vector<8x32xf32>
    %c0_36 = arith.constant 0 : index
    %c0_37 = arith.constant 0 : index
    %68 = vector.load %arg11[%c0_36, %c0_37] : memref<8x32xf32, #tpu.memory_space<vmem>>, vector<8x32xf32>
    tpu.vector_store %arg11[%c0_36, %c0_37], %67 {strides = array<i32>} : memref<8x32xf32, #tpu.memory_space<vmem>>, vector<8x32xf32>,
    return
  }
  func.func @transform_0(%arg0: i32) -> (i32, i32) {
    %c0_i32 = arith.constant 0 : i32
    %c0_i32_0 = arith.constant 0 : i32
    return %arg0, %c0_i32 : i32, i32
  }
  func.func @transform_1(%arg0: i32) -> (i32, i32, i32) {
    %c0_i32 = arith.constant 0 : i32
    %c0_i32_0 = arith.constant 0 : i32
    %c0_i32_1 = arith.constant 0 : i32
    return %arg0, %c0_i32, %c0_i32_0 : i32, i32, i32
  }
  func.func @transform_2(%arg0: i32) -> (i32, i32) {
    %c0_i32 = arith.constant 0 : i32
    %c0_i32_0 = arith.constant 0 : i32
    %c0_i32_1 = arith.constant 0 : i32
    return %c0_i32, %c0_i32_0 : i32, i32
  }
  func.func @transform_3(%arg0: i32) -> (i32, i32) {
    %c0_i32 = arith.constant 0 : i32
    %c0_i32_0 = arith.constant 0 : i32
    %c0_i32_1 = arith.constant 0 : i32
    return %c0_i32, %c0_i32_0 : i32, i32
  }
  func.func @transform_4(%arg0: i32) -> (i32, i32) {
    %c0_i32 = arith.constant 0 : i32
    %c0_i32_0 = arith.constant 0 : i32
    %c0_i32_1 = arith.constant 0 : i32
    return %c0_i32, %c0_i32_0 : i32, i32
  }
  func.func @transform_5(%arg0: i32) -> (i32, i32) {
    %c0_i32 = arith.constant 0 : i32
    %c0_i32_0 = arith.constant 0 : i32
    %c0_i32_1 = arith.constant 0 : i32
    return %c0_i32, %c0_i32_0 : i32, i32
  }
  func.func @transform_6(%arg0: i32) -> (i32, i32) {
    %c0_i32 = arith.constant 0 : i32
    %c0_i32_0 = arith.constant 0 : i32
    %c0_i32_1 = arith.constant 0 : i32
    return %c0_i32, %c0_i32_0 : i32, i32
  }
  func.func @transform_7(%arg0: i32) -> (i32, i32) {
    %c0_i32 = arith.constant 0 : i32
    %c0_i32_0 = arith.constant 0 : i32
    %c0_i32_1 = arith.constant 0 : i32
    return %c0_i32, %c0_i32_0 : i32, i32
  }
  func.func @transform_8(%arg0: i32) -> (i32, i32) {
    %c0_i32 = arith.constant 0 : i32
    %c0_i32_0 = arith.constant 0 : i32
    %c0_i32_1 = arith.constant 0 : i32
    return %c0_i32, %c0_i32_0 : i32, i32
  }
  func.func @transform_9(%arg0: i32) -> (i32, i32) {
    %c0_i32 = arith.constant 0 : i32
    %c0_i32_0 = arith.constant 0 : i32
    %c0_i32_1 = arith.constant 0 : i32
    return %c0_i32, %c0_i32_0 : i32, i32
  }
  func.func @transform_10(%arg0: i32) -> (i32, i32) {
    %c0_i32 = arith.constant 0 : i32
    %c0_i32_0 = arith.constant 0 : i32
    return %arg0, %c0_i32 : i32, i32
  }
  func.func @transform_11(%arg0: i32) -> (i32, i32) {
    %c0_i32 = arith.constant 0 : i32
    %c0_i32_0 = arith.constant 0 : i32
    return %arg0, %c0_i32 : i32, i32
  }
  func.func @transform_12(%arg0: i32) -> (i32, i32) {
    %c0_i32 = arith.constant 0 : i32
    %c0_i32_0 = arith.constant 0 : i32
    return %arg0, %c0_i32 : i32, i32
  }
}

</mosaic_0001>

<llo_original>
// kernel: tpu_custom_call.1
$region0: #{tpu_custom_call.1}
  #allocation0 [shape = 'u32[]', space=smem, size = 0x4, offset = 0x4, fixed_abs, tag = 'smem constant byte address 0x4 - core index']
  #allocation1 [shape = 'u32[144,128]{1,0:T(1,128)}', space=vmem, size = 0x12000, scoped, tag = 'internal scratch']
  %s0 = inlined_call_operand.vmem [shape: f32[16,32], index: 0, kind: input, shape index: {}]
  %s1 = inlined_call_operand.hbm [shape: f32[16,8,32], index: 1, kind: input, shape index: {}]
  %s2 = inlined_call_operand.vmem [shape: f32[32,16], index: 2, kind: input, shape index: {}]
  %s3 = inlined_call_operand.vmem [shape: f32[1,16], index: 3, kind: input, shape index: {}]
  %s4 = inlined_call_operand.vmem [shape: f32[32,32], index: 4, kind: input, shape index: {}]
  %s5 = inlined_call_operand.vmem [shape: f32[1,32], index: 5, kind: input, shape index: {}]
  %s6 = inlined_call_operand.vmem [shape: f32[1,32], index: 6, kind: input, shape index: {}]
  %s7 = inlined_call_operand.vmem [shape: f32[1,32], index: 7, kind: input, shape index: {}]
  %s8 = inlined_call_operand.hbm [shape: f32[32,32], index: 8, kind: input, shape index: {}]
  %s9 = inlined_call_operand.vmem [shape: f32[1,32], index: 9, kind: input, shape index: {}]
  %s10 = inlined_call_operand.hbm [shape: f32[16,32], index: 10, kind: output, shape index: {0}]
  %s11 = inlined_call_operand.vmem [shape: f32[16,8], index: 11, kind: output, shape index: {1}]
  %s12 = inlined_call_operand.hbm [shape: f32[16,32], index: 12, kind: output, shape index: {2}]
  %13 = xla_tuple %s10, %s11, %s12
  %s14 = sld [smem:[#allocation0]]
  $region97: #{tpu_custom_call.1} parent=0
    _
  %s16 = ssub.s32 1, %s14
  %s17 = scalar_select 0, %s16, %s14
  $region1: #{tpu_custom_call.1} parent=0
    #allocation2 [shape = 'u8[65536]{0}', space=vmem, size = 0x10000, scoped, tag = 'input window, operand 1']
    #allocation3 [shape = 's32[2]{0}', space=sflag, size = 0x8, scoped, tag = 'scoped memory for tpu_custom_call.1']
    #allocation4 [shape = 's32[2]{0}', space=sflag, size = 0x8, scoped, tag = 'scoped memory for tpu_custom_call.1']
    #allocation5 [shape = 'u8[16384]{0}', space=vmem, size = 0x4000, scoped, tag = 'input window, operand 8, single buffered']
    #allocation6 [shape = 's32[1]{0}', space=sflag, size = 0x4, scoped, tag = 'scoped memory for tpu_custom_call.1']
    #allocation7 [shape = 'u8[8192]{0}', space=vmem, size = 0x2000, scoped, tag = 'output window, operand 0']
    #allocation8 [shape = 'u8[8192]{0}', space=vmem, size = 0x2000, scoped, tag = 'output window, operand 2']
    #allocation9 [shape = 's32[2]{0}', space=sflag, size = 0x8, scoped, tag = 'scoped memory for tpu_custom_call.1']
    %18 = vsyncpa [#allocation3], 0
    %s19 = scalar_lea.sflag [#allocation3], 1
    %20 = vsyncpa %s19, 0
    %21 = vsyncpa [#allocation6], 0
    %22 = vsyncpa [#allocation4], 0
    %s23 = scalar_lea.sflag [#allocation4], 1
    %24 = vsyncpa %s23, 0
    %25 = vsyncpa [#allocation9], 0
    %s26 = scalar_lea.sflag [#allocation9], 1
    %27 = vsyncpa %s26, 0
    loop: start=0, step=1, limit=4
    $region2: #{tpu_custom_call.1} parent=1 // loop_pre_header
      _
    $region3: #{tpu_custom_call.1} parent=1 // loop_header
      %s29 = sphi 0, %s33
      %p30 = scmp.ge.s32.totalorder %s29, 4
      %s39 = sphi 0, %s41
      %s42 = sphi 0, %s39
      %s43 = sphi 0, %s42
      %s59 = sphi 0, %s43
      %s65 = sphi 0, %s67
      %s68 = sphi 0, %s65
      %s69 = sphi 0, %s68
      %s85 = sphi 0, %s69
      %s89 = sphi 0, %s89
      %s91 = sphi 0, %s89
      %s92 = sphi 0, %s91
      %s106 = sphi 0, %s92
      %s110 = sphi 0, %s110
      %s112 = sphi 0, %s110
      %s113 = sphi 0, %s112
      %s127 = sphi 0, %s113
      %s131 = sphi 0, %s131
      %s133 = sphi 0, %s131
      %s134 = sphi 0, %s133
      %s148 = sphi 0, %s134
      %s152 = sphi 0, %s152
      %s154 = sphi 0, %s152
      %s155 = sphi 0, %s154
      %s169 = sphi 0, %s155
      %s173 = sphi 0, %s173
      %s175 = sphi 0, %s173
      %s176 = sphi 0, %s175
      %s190 = sphi 0, %s176
      %s194 = sphi 0, %s194
      %s196 = sphi 0, %s194
      %s197 = sphi 0, %s196
      %s211 = sphi 0, %s197
      %s215 = sphi 0, %s215
      %s217 = sphi 0, %s215
      %s218 = sphi 0, %s217
      %s232 = sphi 0, %s218
      %s236 = sphi 0, %s236
      %s238 = sphi 0, %s236
      %s239 = sphi 0, %s238
      %s253 = sphi 0, %s239
      %s259 = sphi 0, %s261
      %s262 = sphi 0, %s259
      %s263 = sphi 0, %s262
      %s279 = sphi 0, %s263
      %s285 = sphi 0, %s287
      %s288 = sphi 0, %s285
      %s289 = sphi 0, %s288
      %s305 = sphi 0, %s289
      %s311 = sphi 0, %s313
      %s314 = sphi 0, %s311
      %s315 = sphi 0, %s314
      %s331 = sphi 0, %s315
    $region4: #{tpu_custom_call.1} parent=1 // loop_header_branch
      %32 = sbr.rel (%p30) target = $region8
    $region5: #{tpu_custom_call.1} parent=1 // loop_body
      %s34 = ssub.s32 %s29, 1
      %s35 = ssub.s32 %s29, 2
      %s36 = sadd.s32 %s29, 1
      %s37 = ssub.s32 %s29, %s36
      %p38 = scmp.eq.s32.totalorder %s37, 0
      %s40 = sadd.s32 %s39, 1
      %s41 = scalar_select %p38, %s39, %s40
      %p44 = pneg %p38
      %p45 = scmp.eq.s32.totalorder %s29, 1
      %p46 = por %p44, %p45
      %p47 = scmp.ne.s32.totalorder %s39, %s42
      %p48 = scmp.eq.s32.totalorder %s29, 0
      %p49 = por %p47, %p48
      %p50 = scmp.ne.s32.totalorder %s39, %s42
      %p51 = scmp.eq.s32.totalorder %s34, 1
      %p52 = por %p50, %p51
      %p53 = scmp.ne.s32.totalorder %s42, %s43
      %p54 = scmp.eq.s32.totalorder %s34, 0
      %p55 = por %p53, %p54
      %p56 = scmp.ne.s32.totalorder %s42, %s43
      %p57 = scmp.eq.s32.totalorder %s35, 1
      %p58 = por %p56, %p57
      %p60 = scmp.ne.s32.totalorder %s43, %s59
      %p61 = scmp.eq.s32.totalorder %s35, 0
      %p62 = por %p60, %p61
      %s63 = ssub.s32 %s29, %s36
      %p64 = scmp.eq.s32.totalorder %s63, 0
      %s66 = sadd.s32 %s65, 1
      %s67 = scalar_select %p64, %s65, %s66
      %p70 = pneg %p64
      %p71 = scmp.eq.s32.totalorder %s29, 1
      %p72 = por %p70, %p71
      %p73 = scmp.ne.s32.totalorder %s65, %s68
      %p74 = scmp.eq.s32.totalorder %s29, 0
      %p75 = por %p73, %p74
      %p76 = scmp.ne.s32.totalorder %s65, %s68
      %p77 = scmp.eq.s32.totalorder %s34, 1
      %p78 = por %p76, %p77
      %p79 = scmp.ne.s32.totalorder %s68, %s69
      %p80 = scmp.eq.s32.totalorder %s34, 0
      %p81 = por %p79, %p80
      %p82 = scmp.ne.s32.totalorder %s68, %s69
      %p83 = scmp.eq.s32.totalorder %s35, 1
      %p84 = por %p82, %p83
      %p86 = scmp.ne.s32.totalorder %s69, %s85
      %p87 = scmp.eq.s32.totalorder %s35, 0
      %p88 = por %p86, %p87
      %s90 = sadd.s32 %s89, 1
      %p93 = scmp.eq.s32.totalorder %s29, 1
      %p94 = scmp.ne.s32.totalorder %s89, %s91
      %p95 = scmp.eq.s32.totalorder %s29, 0
      %p96 = por %p94, %p95
      %p97 = scmp.ne.s32.totalorder %s89, %s91
      %p98 = scmp.eq.s32.totalorder %s34, 1
      %p99 = por %p97, %p98
      %p100 = scmp.ne.s32.totalorder %s91, %s92
      %p101 = scmp.eq.s32.totalorder %s34, 0
      %p102 = por %p100, %p101
      %p103 = scmp.ne.s32.totalorder %s91, %s92
      %p104 = scmp.eq.s32.totalorder %s35, 1
      %p105 = por %p103, %p104
      %p107 = scmp.ne.s32.totalorder %s92, %s106
      %p108 = scmp.eq.s32.totalorder %s35, 0
      %p109 = por %p107, %p108
      %s111 = sadd.s32 %s110, 1
      %p114 = scmp.eq.s32.totalorder %s29, 1
      %p115 = scmp.ne.s32.totalorder %s110, %s112
      %p116 = scmp.eq.s32.totalorder %s29, 0
      %p117 = por %p115, %p116
      %p118 = scmp.ne.s32.totalorder %s110, %s112
      %p119 = scmp.eq.s32.totalorder %s34, 1
      %p120 = por %p118, %p119
      %p121 = scmp.ne.s32.totalorder %s112, %s113
      %p122 = scmp.eq.s32.totalorder %s34, 0
      %p123 = por %p121, %p122
      %p124 = scmp.ne.s32.totalorder %s112, %s113
      %p125 = scmp.eq.s32.totalorder %s35, 1
      %p126 = por %p124, %p125
      %p128 = scmp.ne.s32.totalorder %s113, %s127
      %p129 = scmp.eq.s32.totalorder %s35, 0
      %p130 = por %p128, %p129
      %s132 = sadd.s32 %s131, 1
      %p135 = scmp.eq.s32.totalorder %s29, 1
      %p136 = scmp.ne.s32.totalorder %s131, %s133
      %p137 = scmp.eq.s32.totalorder %s29, 0
      %p138 = por %p136, %p137
      %p139 = scmp.ne.s32.totalorder %s131, %s133
      %p140 = scmp.eq.s32.totalorder %s34, 1
      %p141 = por %p139, %p140
      %p142 = scmp.ne.s32.totalorder %s133, %s134
      %p143 = scmp.eq.s32.totalorder %s34, 0
      %p144 = por %p142, %p143
      %p145 = scmp.ne.s32.totalorder %s133, %s134
      %p146 = scmp.eq.s32.totalorder %s35, 1
      %p147 = por %p145, %p146
      %p149 = scmp.ne.s32.totalorder %s134, %s148
      %p150 = scmp.eq.s32.totalorder %s35, 0
      %p151 = por %p149, %p150
      %s153 = sadd.s32 %s152, 1
      %p156 = scmp.eq.s32.totalorder %s29, 1
      %p157 = scmp.ne.s32.totalorder %s152, %s154
      %p158 = scmp.eq.s32.totalorder %s29, 0
      %p159 = por %p157, %p158
      %p160 = scmp.ne.s32.totalorder %s152, %s154
      %p161 = scmp.eq.s32.totalorder %s34, 1
      %p162 = por %p160, %p161
      %p163 = scmp.ne.s32.totalorder %s154, %s155
      %p164 = scmp.eq.s32.totalorder %s34, 0
      %p165 = por %p163, %p164
      %p166 = scmp.ne.s32.totalorder %s154, %s155
      %p167 = scmp.eq.s32.totalorder %s35, 1
      %p168 = por %p166, %p167
      %p170 = scmp.ne.s32.totalorder %s155, %s169
      %p171 = scmp.eq.s32.totalorder %s35, 0
      %p172 = por %p170, %p171
      %s174 = sadd.s32 %s173, 1
      %p177 = scmp.eq.s32.totalorder %s29, 1
      %p178 = scmp.ne.s32.totalorder %s173, %s175
      %p179 = scmp.eq.s32.totalorder %s29, 0
      %p180 = por %p178, %p179
      %p181 = scmp.ne.s32.totalorder %s173, %s175
      %p182 = scmp.eq.s32.totalorder %s34, 1
      %p183 = por %p181, %p182
      %p184 = scmp.ne.s32.totalorder %s175, %s176
      %p185 = scmp.eq.s32.totalorder %s34, 0
      %p186 = por %p184, %p185
      %p187 = scmp.ne.s32.totalorder %s175, %s176
      %p188 = scmp.eq.s32.totalorder %s35, 1
      %p189 = por %p187, %p188
      %p191 = scmp.ne.s32.totalorder %s176, %s190
      %p192 = scmp.eq.s32.totalorder %s35, 0
      %p193 = por %p191, %p192
      %s195 = sadd.s32 %s194, 1
      %p198 = scmp.eq.s32.totalorder %s29, 1
      %p199 = scmp.ne.s32.totalorder %s194, %s196
      %p200 = scmp.eq.s32.totalorder %s29, 0
      %p201 = por %p199, %p200
      %p202 = scmp.ne.s32.totalorder %s194, %s196
      %p203 = scmp.eq.s32.totalorder %s34, 1
      %p204 = por %p202, %p203
      %p205 = scmp.ne.s32.totalorder %s196, %s197
      %p206 = scmp.eq.s32.totalorder %s34, 0
      %p207 = por %p205, %p206
      %p208 = scmp.ne.s32.totalorder %s196, %s197
      %p209 = scmp.eq.s32.totalorder %s35, 1
      %p210 = por %p208, %p209
      %p212 = scmp.ne.s32.totalorder %s197, %s211
      %p213 = scmp.eq.s32.totalorder %s35, 0
      %p214 = por %p212, %p213
      %s216 = sadd.s32 %s215, 1
      %p219 = scmp.eq.s32.totalorder %s29, 1
      %p220 = scmp.ne.s32.totalorder %s215, %s217
      %p221 = scmp.eq.s32.totalorder %s29, 0
      %p222 = por %p220, %p221
      %p223 = scmp.ne.s32.totalorder %s215, %s217
      %p224 = scmp.eq.s32.totalorder %s34, 1
      %p225 = por %p223, %p224
      %p226 = scmp.ne.s32.totalorder %s217, %s218
      %p227 = scmp.eq.s32.totalorder %s34, 0
      %p228 = por %p226, %p227
      %p229 = scmp.ne.s32.totalorder %s217, %s218
      %p230 = scmp.eq.s32.totalorder %s35, 1
      %p231 = por %p229, %p230
      %p233 = scmp.ne.s32.totalorder %s218, %s232
      %p234 = scmp.eq.s32.totalorder %s35, 0
      %p235 = por %p233, %p234
      %s237 = sadd.s32 %s236, 1
      %p240 = scmp.eq.s32.totalorder %s29, 1
      %p241 = scmp.ne.s32.totalorder %s236, %s238
      %p242 = scmp.eq.s32.totalorder %s29, 0
      %p243 = por %p241, %p242
      %p244 = scmp.ne.s32.totalorder %s236, %s238
      %p245 = scmp.eq.s32.totalorder %s34, 1
      %p246 = por %p244, %p245
      %p247 = scmp.ne.s32.totalorder %s238, %s239
      %p248 = scmp.eq.s32.totalorder %s34, 0
      %p249 = por %p247, %p248
      %p250 = scmp.ne.s32.totalorder %s238, %s239
      %p251 = scmp.eq.s32.totalorder %s35, 1
      %p252 = por %p250, %p251
      %p254 = scmp.ne.s32.totalorder %s239, %s253
      %p255 = scmp.eq.s32.totalorder %s35, 0
      %p256 = por %p254, %p255
      %s257 = ssub.s32 %s29, %s36
      %p258 = scmp.eq.s32.totalorder %s257, 0
      %s260 = sadd.s32 %s259, 1
      %s261 = scalar_select %p258, %s259, %s260
      %p264 = pneg %p258
      %p265 = scmp.eq.s32.totalorder %s29, 1
      %p266 = por %p264, %p265
      %p267 = scmp.ne.s32.totalorder %s259, %s262
      %p268 = scmp.eq.s32.totalorder %s29, 0
      %p269 = por %p267, %p268
      %p270 = scmp.ne.s32.totalorder %s259, %s262
      %p271 = scmp.eq.s32.totalorder %s34, 1
      %p272 = por %p270, %p271
      %p273 = scmp.ne.s32.totalorder %s262, %s263
      %p274 = scmp.eq.s32.totalorder %s34, 0
      %p275 = por %p273, %p274
      %p276 = scmp.ne.s32.totalorder %s262, %s263
      %p277 = scmp.eq.s32.totalorder %s35, 1
      %p278 = por %p276, %p277
      %p280 = scmp.ne.s32.totalorder %s263, %s279
      %p281 = scmp.eq.s32.totalorder %s35, 0
      %p282 = por %p280, %p281
      %s283 = ssub.s32 %s29, %s36
      %p284 = scmp.eq.s32.totalorder %s283, 0
      %s286 = sadd.s32 %s285, 1
      %s287 = scalar_select %p284, %s285, %s286
      %p290 = pneg %p284
      %p291 = scmp.eq.s32.totalorder %s29, 1
      %p292 = por %p290, %p291
      %p293 = scmp.ne.s32.totalorder %s285, %s288
      %p294 = scmp.eq.s32.totalorder %s29, 0
      %p295 = por %p293, %p294
      %p296 = scmp.ne.s32.totalorder %s285, %s288
      %p297 = scmp.eq.s32.totalorder %s34, 1
      %p298 = por %p296, %p297
      %p299 = scmp.ne.s32.totalorder %s288, %s289
      %p300 = scmp.eq.s32.totalorder %s34, 0
      %p301 = por %p299, %p300
      %p302 = scmp.ne.s32.totalorder %s288, %s289
      %p303 = scmp.eq.s32.totalorder %s35, 1
      %p304 = por %p302, %p303
      %p306 = scmp.ne.s32.totalorder %s289, %s305
      %p307 = scmp.eq.s32.totalorder %s35, 0
      %p308 = por %p306, %p307
      %s309 = ssub.s32 %s29, %s36
      %p310 = scmp.eq.s32.totalorder %s309, 0
      %s312 = sadd.s32 %s311, 1
      %s313 = scalar_select %p310, %s311, %s312
      %p316 = pneg %p310
      %p317 = scmp.eq.s32.totalorder %s29, 1
      %p318 = por %p316, %p317
      %p319 = scmp.ne.s32.totalorder %s311, %s314
      %p320 = scmp.eq.s32.totalorder %s29, 0
      %p321 = por %p319, %p320
      %p322 = scmp.ne.s32.totalorder %s311, %s314
      %p323 = scmp.eq.s32.totalorder %s34, 1
      %p324 = por %p322, %p323
      %p325 = scmp.ne.s32.totalorder %s314, %s315
      %p326 = scmp.eq.s32.totalorder %s34, 0
      %p327 = por %p325, %p326
      %p328 = scmp.ne.s32.totalorder %s314, %s315
      %p329 = scmp.eq.s32.totalorder %s35, 1
      %p330 = por %p328, %p329
      %p332 = scmp.ne.s32.totalorder %s315, %s331
      %p333 = scmp.eq.s32.totalorder %s35, 0
      %p334 = por %p332, %p333
      %p335 = scmp.le.s32.totalorder 1, %s29
      %p336 = scmp.lt.s32.totalorder %s29, 3
      %p337 = pnand %p335, %p336
      %p338 = pneg %p337
      // Predicated region
      $region9: #{tpu_custom_call.1} parent=5 // pred_check
        _
      $region10: #{tpu_custom_call.1} parent=5 // pred_check_branch
        %340 = sbr.rel (%p337) target = $region12
      $region11: #{tpu_custom_call.1} parent=5 // pred_region
        %s341 = ssub.s32 %s29, 1
        // Predicated region
        $region13: #{tpu_custom_call.1} parent=11 // pred_check
          %p342 = pneg %p102
        $region14: #{tpu_custom_call.1} parent=11 // pred_check_branch
          %344 = sbr.rel (%p342) target = $region16
        $region15: #{tpu_custom_call.1} parent=11 // pred_region
          _
        $region16: #{tpu_custom_call.1} parent=11 // pred_fallthru
          _
        // Predicated region
        $region17: #{tpu_custom_call.1} parent=11 // pred_check
          %p345 = pneg %p123
        $region18: #{tpu_custom_call.1} parent=11 // pred_check_branch
          %347 = sbr.rel (%p345) target = $region20
        $region19: #{tpu_custom_call.1} parent=11 // pred_region
          _
        $region20: #{tpu_custom_call.1} parent=11 // pred_fallthru
          _
        // Predicated region
        $region21: #{tpu_custom_call.1} parent=11 // pred_check
          %p348 = pneg %p144
        $region22: #{tpu_custom_call.1} parent=11 // pred_check_branch
          %350 = sbr.rel (%p348) target = $region24
        $region23: #{tpu_custom_call.1} parent=11 // pred_region
          _
        $region24: #{tpu_custom_call.1} parent=11 // pred_fallthru
          _
        // Predicated region
        $region25: #{tpu_custom_call.1} parent=11 // pred_check
          %p351 = pneg %p165
        $region26: #{tpu_custom_call.1} parent=11 // pred_check_branch
          %353 = sbr.rel (%p351) target = $region28
        $region27: #{tpu_custom_call.1} parent=11 // pred_region
          _
        $region28: #{tpu_custom_call.1} parent=11 // pred_fallthru
          _
        // Predicated region
        $region29: #{tpu_custom_call.1} parent=11 // pred_check
          %p354 = pneg %p186
        $region30: #{tpu_custom_call.1} parent=11 // pred_check_branch
          %356 = sbr.rel (%p354) target = $region32
        $region31: #{tpu_custom_call.1} parent=11 // pred_region
          _
        $region32: #{tpu_custom_call.1} parent=11 // pred_fallthru
          _
        // Predicated region
        $region33: #{tpu_custom_call.1} parent=11 // pred_check
          %p357 = pneg %p207
        $region34: #{tpu_custom_call.1} parent=11 // pred_check_branch
          %359 = sbr.rel (%p357) target = $region36
        $region35: #{tpu_custom_call.1} parent=11 // pred_region
          _
        $region36: #{tpu_custom_call.1} parent=11 // pred_fallthru
          _
        // Predicated region
        $region37: #{tpu_custom_call.1} parent=11 // pred_check
          %p360 = pneg %p228
        $region38: #{tpu_custom_call.1} parent=11 // pred_check_branch
          %362 = sbr.rel (%p360) target = $region40
        $region39: #{tpu_custom_call.1} parent=11 // pred_region
          %s364 = ssub.s32 512, 512
          %365 = vsyncadd [#allocation6], %s364
          %s366 = sshll.u32 [#allocation5], 4
          %s367 = int_to_ptr.vmem [resolvable:$true] %s366
          %372 = dma.hbm_to_vmem [thread:$0]  %s8, 512, %s367, [#allocation6], 128, 128, 8
        $region40: #{tpu_custom_call.1} parent=11 // pred_fallthru
          _
        // Predicated region
        $region41: #{tpu_custom_call.1} parent=11 // pred_check
          %p373 = pneg %p249
        $region42: #{tpu_custom_call.1} parent=11 // pred_check_branch
          %375 = sbr.rel (%p373) target = $region44
        $region43: #{tpu_custom_call.1} parent=11 // pred_region
          _
        $region44: #{tpu_custom_call.1} parent=11 // pred_fallthru
          _
      $region12: #{tpu_custom_call.1} parent=5 // pred_fallthru
        _
      %p376 = scmp.lt.s32.totalorder %s29, 2
      // Predicated region
      $region45: #{tpu_custom_call.1} parent=5 // pred_check
        %p377 = pneg %p376
      $region46: #{tpu_custom_call.1} parent=5 // pred_check_branch
        %379 = sbr.rel (%p377) target = $region48
      $region47: #{tpu_custom_call.1} parent=5 // pred_region
        // Predicated region
        $region49: #{tpu_custom_call.1} parent=47 // pred_check
          %p380 = pneg %p49
        $region50: #{tpu_custom_call.1} parent=47 // pred_check_branch
          %382 = sbr.rel (%p380) target = $region52
        $region51: #{tpu_custom_call.1} parent=47 // pred_region
          %p383 = scmp.lt.s32.totalorder %s29, 1
          %s384 = scalar_select %p383, %s29, 1
          %s385 = smul.addr %s384, 8
          %s386 = scalar_lea.vmem %s0, %s385
        $region52: #{tpu_custom_call.1} parent=47 // pred_fallthru
          _
        // Predicated region
        $region53: #{tpu_custom_call.1} parent=47 // pred_check
          %p387 = pneg %p75
        $region54: #{tpu_custom_call.1} parent=47 // pred_check_branch
          %389 = sbr.rel (%p387) target = $region56
        $region55: #{tpu_custom_call.1} parent=47 // pred_region
          %s390 = sand.u32 %s65, 1
          %s391 = scalar_lea.sflag [#allocation3], %s390
          %s392 = sand.u32 %s65, 1
          %s393 = smul.addr %s392, 64
          %s394 = scalar_lea.vmem [#allocation2], %s393
          %s395 = smul.u32 8, %s29
          %s397 = ssub.s32 1024, 1024
          %398 = vsyncadd %s391, %s397
          %s399 = smul.addr %s395, 128
          %s400 = scalar_lea.hbm %s1, %s399
          %s401 = sshll.u32 %s394, 4
          %s402 = int_to_ptr.vmem [resolvable:$true] %s401
          %407 = dma.hbm_to_vmem [thread:$0]  %s400, 1024, %s402, %s391, 128, 128, 8
        $region56: #{tpu_custom_call.1} parent=47 // pred_fallthru
          _
      $region48: #{tpu_custom_call.1} parent=5 // pred_fallthru
        _
      %p408 = scmp.le.s32.totalorder 1, %s29
      %p409 = scmp.lt.s32.totalorder %s29, 3
      %p410 = pnand %p408, %p409
      %p411 = pneg %p410
      // Predicated region
      $region57: #{tpu_custom_call.1} parent=5 // pred_check
        _
      $region58: #{tpu_custom_call.1} parent=5 // pred_check_branch
        %413 = sbr.rel (%p410) target = $region60
      $region59: #{tpu_custom_call.1} parent=5 // pred_region
        %s414 = ssub.s32 %s29, 1
        %s415 = sand.u32 %s68, 1
        %s416 = scalar_lea.sflag [#allocation3], %s415
        %s417 = sand.u32 %s68, 1
        %s418 = smul.addr %s417, 64
        %s419 = scalar_lea.vmem [#allocation2], %s418
        // Predicated region
        $region61: #{tpu_custom_call.1} parent=59 // pred_check
          %p420 = pneg %p81
        $region62: #{tpu_custom_call.1} parent=59 // pred_check_branch
          %422 = sbr.rel (%p420) target = $region64
        $region63: #{tpu_custom_call.1} parent=59 // pred_region
          %423 = dma.done %s416, 1024
        $region64: #{tpu_custom_call.1} parent=59 // pred_fallthru
          _
        // Predicated region
        $region65: #{tpu_custom_call.1} parent=59 // pred_check
          %p424 = pneg %p228
        $region66: #{tpu_custom_call.1} parent=59 // pred_check_branch
          %426 = sbr.rel (%p424) target = $region68
        $region67: #{tpu_custom_call.1} parent=59 // pred_region
          %427 = dma.done [#allocation6], 512
        $region68: #{tpu_custom_call.1} parent=59 // pred_fallthru
          _
        %p428 = scmp.lt.s32.totalorder %s34, 1
        %s429 = scalar_select %p428, %s34, 1
        %s430 = smul.addr %s429, 8
        %s431 = scalar_lea.vmem %s0, %s430
        %p432 = pneg %p55
        %p433 = pneg %p52
        %s434 = sand.u32 %s68, 1
        %s435 = scalar_lea.sflag [#allocation3], %s434
        %s436 = sand.u32 %s68, 1
        %s437 = smul.addr %s436, 64
        %s438 = scalar_lea.vmem [#allocation2], %s437
        %p439 = pneg %p81
        %p440 = pneg %p78
        %p441 = pneg %p102
        %p442 = pneg %p99
        %p443 = pneg %p123
        %p444 = pneg %p120
        %p445 = pneg %p144
        %p446 = pneg %p141
        %p447 = pneg %p165
        %p448 = pneg %p162
        %p449 = pneg %p186
        %p450 = pneg %p183
        %p451 = pneg %p207
        %p452 = pneg %p204
        %p453 = pneg %p228
        %p454 = pneg %p225
        %p455 = pneg %p249
        %p456 = pneg %p246
        %p457 = pneg %p275
        %p458 = pneg %p272
        %s459 = sand.u32 %s262, 1
        %s460 = scalar_lea.sflag [#allocation4], %s459
        %s461 = sand.u32 %s262, 1
        %s462 = smul.addr %s461, 8
        %s463 = scalar_lea.vmem [#allocation7], %s462
        %p464 = pneg %p301
        %p465 = pneg %p298
        %p466 = scmp.lt.s32.totalorder %s34, 1
        %s467 = scalar_select %p466, %s34, 1
        %s468 = smul.addr %s467, 8
        %s469 = scalar_lea.vmem %s11, %s468
        %p470 = pneg %p327
        %p471 = pneg %p324
        %s472 = sand.u32 %s314, 1
        %s473 = scalar_lea.sflag [#allocation9], %s472
        %s474 = sand.u32 %s314, 1
        %s475 = smul.addr %s474, 8
        %s476 = scalar_lea.vmem [#allocation8], %s475
        %p477 = scmp.lt.s32.totalorder %s34, 1
        %s478 = scalar_select %p477, %s34, 1
        %s479 = smul.addr %s478, 8
        %s480 = scalar_lea.vmem %s0, %s479
        %s481 = smul.u32 8, %s34
        %p482 = scmp.lt.s32.totalorder %s34, 1
        %s483 = scalar_select %p482, %s34, 1
        %s484 = smul.addr %s483, 8
        %s485 = scalar_lea.vmem %s11, %s484
        %v486 = vld [vmem:[%s419] sm:$0xff]
        %v487 = vld [vmem:[%s419 + $0x8] sm:$0xff]
        %v488 = vld [vmem:[%s419 + $0x10] sm:$0xff]
        %v489 = vld [vmem:[%s419 + $0x18] sm:$0xff]
        %v490 = vld [vmem:[%s419 + $0x20] sm:$0xff]
        %v491 = vld [vmem:[%s419 + $0x28] sm:$0xff]
        %v492 = vld [vmem:[%s419 + $0x30] sm:$0xff]
        %v493 = vld [vmem:[%s419 + $0x38] sm:$0xff]
        %v494 = vld [vmem:[%s480] sm:$0xff]
        %v495 = vld [vmem:[%s2] sm:$0xff]
        %v496 = vld [vmem:[%s2 + $0x8] sm:$0xff]
        %v497 = vld [vmem:[%s2 + $0x10] sm:$0xff]
        %v498 = vld [vmem:[%s2 + $0x18] sm:$0xff]
        %vm499 = vcmask 261120
        %v501 = vsel %vm499, %v486, 0
        %v504 = vsel %vm499, %v487, 0
        %v507 = vsel %vm499, %v488, 0
        %v510 = vsel %vm499, %v489, 0
        %v513 = vsel %vm499, %v490, 0
        %v516 = vsel %vm499, %v491, 0
        %v519 = vsel %vm499, %v492, 0
        %v522 = vsel %vm499, %v493, 0
        %524 = vmatprep.subr.mxu0 0.0
        %525 = vmatpush1.msra.mxu0 0.0
        %526 = vmatprep.subr.mxu0 0.0
        %527 = vmatpush1.msra.mxu0 0.0
        %528 = vmatprep.subr.mxu0 0.0
        %529 = vmatpush1.msra.mxu0 0.0
        %530 = vmatprep.subr.mxu0 0.0
        %531 = vmatpush1.msra.mxu0 0.0
        %532 = vmatprep.subr.mxu0 0.0
        %533 = vmatpush1.msra.mxu0 0.0
        %534 = vmatprep.subr.mxu0 0.0
        %535 = vmatpush1.msra.mxu0 0.0
        %536 = vmatprep.subr.mxu0 0.0
        %537 = vmatpush1.msra.mxu0 0.0
        %538 = vmatprep.subr.mxu0 0.0
        %539 = vmatpush1.msra.mxu0 0.0
        %540 = vmatprep.subr.mxu0 0.0
        %541 = vmatpush1.msra.mxu0 0.0
        %542 = vmatprep.subr.mxu0 0.0
        %543 = vmatpush1.msra.mxu0 0.0
        %544 = vmatprep.subr.mxu0 0.0
        %545 = vmatpush1.msra.mxu0 0.0
        %546 = vmatprep.subr.mxu0 0.0
        %547 = vmatpush1.msra.mxu0 0.0
        %548 = vmatprep.subr.mxu0 0.0
        %549 = vmatpush1.msra.mxu0 %v498
        %550 = vmatprep.subr.mxu0 0.0
        %551 = vmatpush1.msra.mxu0 %v497
        %552 = vmatprep.subr.mxu0 0.0
        %553 = vmatpush1.msra.mxu0 %v496
        %554 = vmatprep.subr.mxu0 0.0
        %555 = vmatpush1.msra.mxu0 %v495
        %556 = vmatprep.subr.mxu0 0.0
        %557 = vmatpush2.msra.mxu0 0.0
        %558 = vmatprep.subr.mxu0 0.0
        %559 = vmatpush2.msra.mxu0 0.0
        %560 = vmatprep.subr.mxu0 0.0
        %561 = vmatpush2.msra.mxu0 0.0
        %562 = vmatprep.subr.mxu0 0.0
        %563 = vmatpush2.msra.mxu0 0.0
        %564 = vmatprep.subr.mxu0 0.0
        %565 = vmatpush2.msra.mxu0 0.0
        %566 = vmatprep.subr.mxu0 0.0
        %567 = vmatpush2.msra.mxu0 0.0
        %568 = vmatprep.subr.mxu0 0.0
        %569 = vmatpush2.msra.mxu0 0.0
        %570 = vmatprep.subr.mxu0 0.0
        %571 = vmatpush2.msra.mxu0 0.0
        %572 = vmatprep.subr.mxu0 0.0
        %573 = vmatpush2.msra.mxu0 0.0
        %574 = vmatprep.subr.mxu0 0.0
        %575 = vmatpush2.msra.mxu0 0.0
        %576 = vmatprep.subr.mxu0 0.0
        %577 = vmatpush2.msra.mxu0 0.0
        %578 = vmatprep.subr.mxu0 0.0
        %579 = vmatpush2.msra.mxu0 0.0
        %580 = vmatprep.subr.mxu0 0.0
        %581 = vmatpush2.msra.mxu0 0.0
        %582 = vmatprep.subr.mxu0 0.0
        %583 = vmatpush2.msra.mxu0 0.0
        %584 = vmatprep.subr.mxu0 0.0
        %585 = vmatpush2.msra.mxu0 0.0
        %586 = vmatprep.subr.mxu0 0.0
        %587 = vmatpush2.msra.mxu0 0.0
        %588 = vmatprep.mubr.f32.mxu0 0.0
        %589 = vmatmul.mubr.f32.gmra.mxu0 %v501
        %v590 = vpop.f32.mrf.mxu0
        %v591 = vadd.f32 0.0, %v590
        %v592 = vpop.f32.mrf.mxu0
        %593 = vmatprep.mubr.f32.mxu0 0.0
        %594 = vmatmul.mubr.f32.gmra.mxu0 %v504
        %v595 = vpop.f32.mrf.mxu0
        %v596 = vadd.f32 0.0, %v595
        %v597 = vpop.f32.mrf.mxu0
        %598 = vmatprep.mubr.f32.mxu0 0.0
        %599 = vmatmul.mubr.f32.gmra.mxu0 %v507
        %v600 = vpop.f32.mrf.mxu0
        %v601 = vadd.f32 0.0, %v600
        %v602 = vpop.f32.mrf.mxu0
        %603 = vmatprep.mubr.f32.mxu0 0.0
        %604 = vmatmul.mubr.f32.gmra.mxu0 %v510
        %v605 = vpop.f32.mrf.mxu0
        %v606 = vadd.f32 0.0, %v605
        %v607 = vpop.f32.mrf.mxu0
        %608 = vmatprep.mubr.f32.mxu0 0.0
        %609 = vmatmul.mubr.f32.gmra.mxu0 %v513
        %v610 = vpop.f32.mrf.mxu0
        %v611 = vadd.f32 0.0, %v610
        %v612 = vpop.f32.mrf.mxu0
        %613 = vmatprep.mubr.f32.mxu0 0.0
        %614 = vmatmul.mubr.f32.gmra.mxu0 %v516
        %v615 = vpop.f32.mrf.mxu0
        %v616 = vadd.f32 0.0, %v615
        %v617 = vpop.f32.mrf.mxu0
        %618 = vmatprep.mubr.f32.mxu0 0.0
        %619 = vmatmul.mubr.f32.gmra.mxu0 %v519
        %v620 = vpop.f32.mrf.mxu0
        %v621 = vadd.f32 0.0, %v620
        %v622 = vpop.f32.mrf.mxu0
        %623 = vmatprep.mubr.f32.mxu0 0.0
        %624 = vmatmul.mubr.f32.gmra.mxu0 %v522
        %v625 = vpop.f32.mrf.mxu0
        %v626 = vadd.f32 0.0, %v625
        %v627 = vpop.f32.mrf.mxu0
        %628 = vdwg.mxu0
        %v629 = vtanh.pop %v591
        %v630 = vtanh.pop %v596
        %v631 = vtanh.pop %v601
        %v632 = vtanh.pop %v606
        %v633 = vtanh.pop %v611
        %v634 = vtanh.pop %v616
        %v635 = vtanh.pop %v621
        %v636 = vtanh.pop %v626
        %v637 = vld [vmem:[%s3] sm:$0x1]
        %v639 = vlaneseq
        %v640 = vshrl.u32 %v639, 7
        %v641 = vsub.s32 0, %v640
        %v642 = vrot.slane %v637, %v641
        %v644 = vmul.f32 %v629, %v642
        %v645 = vmul.f32 %v630, %v642
        %v646 = vmul.f32 %v631, %v642
        %v647 = vmul.f32 %v632, %v642
        %v648 = vmul.f32 %v633, %v642
        %v649 = vmul.f32 %v634, %v642
        %v650 = vmul.f32 %v635, %v642
        %v651 = vmul.f32 %v636, %v642
        %vm652 = vcmask 130048
        %v653 = vsel %vm652, %v644, 0.0
        %654 = vadd.xlane.f32.xlu0 %v653
        %v655 = vpop.xlane.xlu0 %654
        %v656 = vsel %vm652, %v645, 0.0
        %657 = vadd.xlane.f32.xlu0 %v656
        %v658 = vpop.xlane.xlu0 %657
        %v659 = vsel %vm652, %v646, 0.0
        %660 = vadd.xlane.f32.xlu0 %v659
        %v661 = vpop.xlane.xlu0 %660
        %v662 = vsel %vm652, %v647, 0.0
        %663 = vadd.xlane.f32.xlu0 %v662
        %v664 = vpop.xlane.xlu0 %663
        %v665 = vsel %vm652, %v648, 0.0
        %666 = vadd.xlane.f32.xlu0 %v665
        %v667 = vpop.xlane.xlu0 %666
        %v668 = vsel %vm652, %v649, 0.0
        %669 = vadd.xlane.f32.xlu0 %v668
        %v670 = vpop.xlane.xlu0 %669
        %v671 = vsel %vm652, %v650, 0.0
        %672 = vadd.xlane.f32.xlu0 %v671
        %v673 = vpop.xlane.xlu0 %672
        %v674 = vsel %vm652, %v651, 0.0
        %675 = vadd.xlane.f32.xlu0 %v674
        %v676 = vpop.xlane.xlu0 %675
        %v685 = vlaneseq
        %v686 = vand.u32 %v685, 127
        %v687 = vlaneseq
        %v688 = vshrl.u32 %v687, 7
        %v689 = vsub.s32 %v686, %v688
        %v690 = vrot.slane %v655, %v689
        %v691 = vlaneseq
        %v692 = vshrl.u32 %v691, 7
        %v693 = vsub.s32 %v686, %v692
        %v694 = vrot.slane %v658, %v693
        %v695 = vlaneseq
        %v696 = vshrl.u32 %v695, 7
        %v697 = vsub.s32 %v686, %v696
        %v698 = vrot.slane %v661, %v697
        %v699 = vlaneseq
        %v700 = vshrl.u32 %v699, 7
        %v701 = vsub.s32 %v686, %v700
        %v702 = vrot.slane %v664, %v701
        %v703 = vlaneseq
        %v704 = vshrl.u32 %v703, 7
        %v705 = vsub.s32 %v686, %v704
        %v706 = vrot.slane %v667, %v705
        %v707 = vlaneseq
        %v708 = vshrl.u32 %v707, 7
        %v709 = vsub.s32 %v686, %v708
        %v710 = vrot.slane %v670, %v709
        %v711 = vlaneseq
        %v712 = vshrl.u32 %v711, 7
        %v713 = vsub.s32 %v686, %v712
        %v714 = vrot.slane %v673, %v713
        %v715 = vlaneseq
        %v716 = vshrl.u32 %v715, 7
        %v717 = vsub.s32 %v686, %v716
        %v718 = vrot.slane %v676, %v717
        %vm719 = vcmask 1041409
        %v720 = vsel %vm719, %v694, %v690
        %vm721 = vcmask 1042434
        %v722 = vsel %vm721, %v698, %v720
        %vm723 = vcmask 1043459
        %v724 = vsel %vm723, %v702, %v722
        %vm725 = vcmask 1044484
        %v726 = vsel %vm725, %v706, %v724
        %vm727 = vcmask 1045509
        %v728 = vsel %vm727, %v710, %v726
        %vm729 = vcmask 1046534
        %v730 = vsel %vm729, %v714, %v728
        %vm731 = vcmask 1047559
        %v732 = vsel %vm731, %v718, %v730
        %vm734 = vcmask 64512
        %v735 = vsel %vm734, %v732, -inf
        %736 = vmax.xlane.f32.xlu0 %v735
        %v737 = vpop.xlane.xlu0 %736
        %v739 = vlaneseq
        %v740 = vshrl.u32 %v739, 7
        %v741 = vsub.s32 0, %v740
        %v742 = vrot.slane %v737, %v741
        %v743 = vlaneseq
        %v744 = vshrl.u32 %v743, 7
        %v745 = vsub.s32 1, %v744
        %v746 = vrot.slane %v737, %v745
        %v747 = vlaneseq
        %v748 = vshrl.u32 %v747, 7
        %v749 = vsub.s32 2, %v748
        %v750 = vrot.slane %v737, %v749
        %v751 = vlaneseq
        %v752 = vshrl.u32 %v751, 7
        %v753 = vsub.s32 3, %v752
        %v754 = vrot.slane %v737, %v753
        %v755 = vlaneseq
        %v756 = vshrl.u32 %v755, 7
        %v757 = vsub.s32 4, %v756
        %v758 = vrot.slane %v737, %v757
        %v759 = vlaneseq
        %v760 = vshrl.u32 %v759, 7
        %v761 = vsub.s32 5, %v760
        %v762 = vrot.slane %v737, %v761
        %v763 = vlaneseq
        %v764 = vshrl.u32 %v763, 7
        %v765 = vsub.s32 6, %v764
        %v766 = vrot.slane %v737, %v765
        %v767 = vlaneseq
        %v768 = vshrl.u32 %v767, 7
        %v769 = vsub.s32 7, %v768
        %v770 = vrot.slane %v737, %v769
        %v779 = vsub.f32 %v655, %v742
        %v780 = vsub.f32 %v658, %v746
        %v781 = vsub.f32 %v661, %v750
        %v782 = vsub.f32 %v664, %v754
        %v783 = vsub.f32 %v667, %v758
        %v784 = vsub.f32 %v670, %v762
        %v785 = vsub.f32 %v673, %v766
        %v786 = vsub.f32 %v676, %v770
        %v787 = vmul.f32 %v779, 1.442695
        %v788 = vpow.pop %v787
        %v789 = vmul.f32 %v780, 1.442695
        %v790 = vpow.pop %v789
        %v791 = vmul.f32 %v781, 1.442695
        %v792 = vpow.pop %v791
        %v793 = vmul.f32 %v782, 1.442695
        %v794 = vpow.pop %v793
        %v795 = vmul.f32 %v783, 1.442695
        %v796 = vpow.pop %v795
        %v797 = vmul.f32 %v784, 1.442695
        %v798 = vpow.pop %v797
        %v799 = vmul.f32 %v785, 1.442695
        %v800 = vpow.pop %v799
        %v801 = vmul.f32 %v786, 1.442695
        %v802 = vpow.pop %v801
        %811 = vset.pattern.permute.xlu0 0
        %812 = vperm.xlu0 %811, %v788
        %v813 = vpop.permute.xlu0 %812
        %814 = vset.pattern.permute.xlu0 0
        %815 = vperm.xlu0 %814, %v790
        %v816 = vpop.permute.xlu0 %815
        %817 = vset.pattern.permute.xlu0 0
        %818 = vperm.xlu0 %817, %v792
        %v819 = vpop.permute.xlu0 %818
        %820 = vset.pattern.permute.xlu0 0
        %821 = vperm.xlu0 %820, %v794
        %v822 = vpop.permute.xlu0 %821
        %823 = vset.pattern.permute.xlu0 0
        %824 = vperm.xlu0 %823, %v796
        %v825 = vpop.permute.xlu0 %824
        %826 = vset.pattern.permute.xlu0 0
        %827 = vperm.xlu0 %826, %v798
        %v828 = vpop.permute.xlu0 %827
        %829 = vset.pattern.permute.xlu0 0
        %830 = vperm.xlu0 %829, %v800
        %v831 = vpop.permute.xlu0 %830
        %832 = vset.pattern.permute.xlu0 0
        %833 = vperm.xlu0 %832, %v802
        %v834 = vpop.permute.xlu0 %833
        %v835 = vlaneseq
        %v836 = vshrl.u32 %v835, 7
        %v837 = vsub.s32 %v686, %v836
        %v838 = vrot.slane %v813, %v837
        %v839 = vlaneseq
        %v840 = vshrl.u32 %v839, 7
        %v841 = vsub.s32 %v686, %v840
        %v842 = vrot.slane %v816, %v841
        %v843 = vlaneseq
        %v844 = vshrl.u32 %v843, 7
        %v845 = vsub.s32 %v686, %v844
        %v846 = vrot.slane %v819, %v845
        %v847 = vlaneseq
        %v848 = vshrl.u32 %v847, 7
        %v849 = vsub.s32 %v686, %v848
        %v850 = vrot.slane %v822, %v849
        %v851 = vlaneseq
        %v852 = vshrl.u32 %v851, 7
        %v853 = vsub.s32 %v686, %v852
        %v854 = vrot.slane %v825, %v853
        %v855 = vlaneseq
        %v856 = vshrl.u32 %v855, 7
        %v857 = vsub.s32 %v686, %v856
        %v858 = vrot.slane %v828, %v857
        %v859 = vlaneseq
        %v860 = vshrl.u32 %v859, 7
        %v861 = vsub.s32 %v686, %v860
        %v862 = vrot.slane %v831, %v861
        %v863 = vlaneseq
        %v864 = vshrl.u32 %v863, 7
        %v865 = vsub.s32 %v686, %v864
        %v866 = vrot.slane %v834, %v865
        %v867 = vsel %vm719, %v842, %v838
        %v868 = vsel %vm721, %v846, %v867
        %v869 = vsel %vm723, %v850, %v868
        %v870 = vsel %vm725, %v854, %v869
        %v871 = vsel %vm727, %v858, %v870
        %v872 = vsel %vm729, %v862, %v871
        %v873 = vsel %vm731, %v866, %v872
        %v875 = vsel %vm734, %v873, 0.0
        %876 = vadd.xlane.f32.xlu0 %v875
        %v877 = vpop.xlane.xlu0 %876
        %v878 = vrcp.pop %v877
        %v880 = vlaneseq
        %v881 = vshrl.u32 %v880, 7
        %v882 = vsub.s32 0, %v881
        %v883 = vrot.slane %v878, %v882
        %v884 = vlaneseq
        %v885 = vshrl.u32 %v884, 7
        %v886 = vsub.s32 1, %v885
        %v887 = vrot.slane %v878, %v886
        %v888 = vlaneseq
        %v889 = vshrl.u32 %v888, 7
        %v890 = vsub.s32 2, %v889
        %v891 = vrot.slane %v878, %v890
        %v892 = vlaneseq
        %v893 = vshrl.u32 %v892, 7
        %v894 = vsub.s32 3, %v893
        %v895 = vrot.slane %v878, %v894
        %v896 = vlaneseq
        %v897 = vshrl.u32 %v896, 7
        %v898 = vsub.s32 4, %v897
        %v899 = vrot.slane %v878, %v898
        %v900 = vlaneseq
        %v901 = vshrl.u32 %v900, 7
        %v902 = vsub.s32 5, %v901
        %v903 = vrot.slane %v878, %v902
        %v904 = vlaneseq
        %v905 = vshrl.u32 %v904, 7
        %v906 = vsub.s32 6, %v905
        %v907 = vrot.slane %v878, %v906
        %v908 = vlaneseq
        %v909 = vshrl.u32 %v908, 7
        %v910 = vsub.s32 7, %v909
        %v911 = vrot.slane %v878, %v910
        %v920 = vmul.f32 %v788, %v883
        %v921 = vmul.f32 %v790, %v887
        %v922 = vmul.f32 %v792, %v891
        %v923 = vmul.f32 %v794, %v895
        %v924 = vmul.f32 %v796, %v899
        %v925 = vmul.f32 %v798, %v903
        %v926 = vmul.f32 %v800, %v907
        %v927 = vmul.f32 %v802, %v911
        %936 = vset.pattern.permute.xlu0 0
        %937 = vperm.xlu0 %936, %v920
        %v938 = vpop.permute.xlu0 %937
        %939 = vset.pattern.permute.xlu0 0
        %940 = vperm.xlu0 %939, %v921
        %v941 = vpop.permute.xlu0 %940
        %942 = vset.pattern.permute.xlu0 0
        %943 = vperm.xlu0 %942, %v922
        %v944 = vpop.permute.xlu0 %943
        %945 = vset.pattern.permute.xlu0 0
        %946 = vperm.xlu0 %945, %v923
        %v947 = vpop.permute.xlu0 %946
        %948 = vset.pattern.permute.xlu0 0
        %949 = vperm.xlu0 %948, %v924
        %v950 = vpop.permute.xlu0 %949
        %951 = vset.pattern.permute.xlu0 0
        %952 = vperm.xlu0 %951, %v925
        %v953 = vpop.permute.xlu0 %952
        %954 = vset.pattern.permute.xlu0 0
        %955 = vperm.xlu0 %954, %v926
        %v956 = vpop.permute.xlu0 %955
        %957 = vset.pattern.permute.xlu0 0
        %958 = vperm.xlu0 %957, %v927
        %v959 = vpop.permute.xlu0 %958
        %v960 = vlaneseq
        %v961 = vshrl.u32 %v960, 7
        %v962 = vsub.s32 %v686, %v961
        %v963 = vrot.slane %v938, %v962
        %v964 = vlaneseq
        %v965 = vshrl.u32 %v964, 7
        %v966 = vsub.s32 %v686, %v965
        %v967 = vrot.slane %v941, %v966
        %v968 = vlaneseq
        %v969 = vshrl.u32 %v968, 7
        %v970 = vsub.s32 %v686, %v969
        %v971 = vrot.slane %v944, %v970
        %v972 = vlaneseq
        %v973 = vshrl.u32 %v972, 7
        %v974 = vsub.s32 %v686, %v973
        %v975 = vrot.slane %v947, %v974
        %v976 = vlaneseq
        %v977 = vshrl.u32 %v976, 7
        %v978 = vsub.s32 %v686, %v977
        %v979 = vrot.slane %v950, %v978
        %v980 = vlaneseq
        %v981 = vshrl.u32 %v980, 7
        %v982 = vsub.s32 %v686, %v981
        %v983 = vrot.slane %v953, %v982
        %v984 = vlaneseq
        %v985 = vshrl.u32 %v984, 7
        %v986 = vsub.s32 %v686, %v985
        %v987 = vrot.slane %v956, %v986
        %v988 = vlaneseq
        %v989 = vshrl.u32 %v988, 7
        %v990 = vsub.s32 %v686, %v989
        %v991 = vrot.slane %v959, %v990
        %v992 = vsel %vm719, %v967, %v963
        %v993 = vsel %vm721, %v971, %v992
        %v994 = vsel %vm723, %v975, %v993
        %v995 = vsel %vm725, %v979, %v994
        %v996 = vsel %vm727, %v983, %v995
        %v997 = vsel %vm729, %v987, %v996
        %v998 = vsel %vm731, %v991, %v997
        %1000 = vst.msk [vmem:[%s485] sm:$0xff] %vm734, %v998
        %v1009 = vmul.f32 %v938, %v486
        %v1010 = vmul.f32 %v941, %v487
        %v1011 = vmul.f32 %v944, %v488
        %v1012 = vmul.f32 %v947, %v489
        %v1013 = vmul.f32 %v950, %v490
        %v1014 = vmul.f32 %v953, %v491
        %v1015 = vmul.f32 %v956, %v492
        %v1016 = vmul.f32 %v959, %v493
        %v1017 = vsel %vm499, %v1009, 0.0
        %v1018 = vrot.slane %v1017, 4
        %v1019 = vadd.f32 %v1017, %v1018
        %v1020 = vrot.slane %v1019, 2
        %v1021 = vadd.f32 %v1019, %v1020
        %v1022 = vrot.slane %v1021, 1
        %v1023 = vadd.f32 %v1021, %v1022
        %v1024 = vsel %vm499, %v1010, 0.0
        %v1025 = vrot.slane %v1024, 4
        %v1026 = vadd.f32 %v1024, %v1025
        %v1027 = vrot.slane %v1026, 2
        %v1028 = vadd.f32 %v1026, %v1027
        %v1029 = vrot.slane %v1028, 1
        %v1030 = vadd.f32 %v1028, %v1029
        %v1031 = vsel %vm499, %v1011, 0.0
        %v1032 = vrot.slane %v1031, 4
        %v1033 = vadd.f32 %v1031, %v1032
        %v1034 = vrot.slane %v1033, 2
        %v1035 = vadd.f32 %v1033, %v1034
        %v1036 = vrot.slane %v1035, 1
        %v1037 = vadd.f32 %v1035, %v1036
        %v1038 = vsel %vm499, %v1012, 0.0
        %v1039 = vrot.slane %v1038, 4
        %v1040 = vadd.f32 %v1038, %v1039
        %v1041 = vrot.slane %v1040, 2
        %v1042 = vadd.f32 %v1040, %v1041
        %v1043 = vrot.slane %v1042, 1
        %v1044 = vadd.f32 %v1042, %v1043
        %v1045 = vsel %vm499, %v1013, 0.0
        %v1046 = vrot.slane %v1045, 4
        %v1047 = vadd.f32 %v1045, %v1046
        %v1048 = vrot.slane %v1047, 2
        %v1049 = vadd.f32 %v1047, %v1048
        %v1050 = vrot.slane %v1049, 1
        %v1051 = vadd.f32 %v1049, %v1050
        %v1052 = vsel %vm499, %v1014, 0.0
        %v1053 = vrot.slane %v1052, 4
        %v1054 = vadd.f32 %v1052, %v1053
        %v1055 = vrot.slane %v1054, 2
        %v1056 = vadd.f32 %v1054, %v1055
        %v1057 = vrot.slane %v1056, 1
        %v1058 = vadd.f32 %v1056, %v1057
        %v1059 = vsel %vm499, %v1015, 0.0
        %v1060 = vrot.slane %v1059, 4
        %v1061 = vadd.f32 %v1059, %v1060
        %v1062 = vrot.slane %v1061, 2
        %v1063 = vadd.f32 %v1061, %v1062
        %v1064 = vrot.slane %v1063, 1
        %v1065 = vadd.f32 %v1063, %v1064
        %v1066 = vsel %vm499, %v1016, 0.0
        %v1067 = vrot.slane %v1066, 4
        %v1068 = vadd.f32 %v1066, %v1067
        %v1069 = vrot.slane %v1068, 2
        %v1070 = vadd.f32 %v1068, %v1069
        %v1071 = vrot.slane %v1070, 1
        %v1072 = vadd.f32 %v1070, %v1071
        %v1073 = vld [vmem:[%s4] sm:$0xff]
        %v1074 = vld [vmem:[%s4 + $0x8] sm:$0xff]
        %v1075 = vld [vmem:[%s4 + $0x10] sm:$0xff]
        %v1076 = vld [vmem:[%s4 + $0x18] sm:$0xff]
        %v1077 = vld [vmem:[%s5] sm:$0x1]
        %v1079 = vlaneseq
        %v1080 = vshrl.u32 %v1079, 7
        %v1081 = vsub.s32 0, %v1080
        %v1082 = vrot.slane %v1077, %v1081
        %v1092 = vsel %vm719, %v1030, %v1023
        %v1093 = vsel %vm721, %v1037, %v1092
        %v1094 = vsel %vm723, %v1044, %v1093
        %v1095 = vsel %vm725, %v1051, %v1094
        %v1096 = vsel %vm727, %v1058, %v1095
        %v1097 = vsel %vm729, %v1065, %v1096
        %v1098 = vsel %vm731, %v1072, %v1097
        %v1099 = vsel %vm499, %v1098, 0
        %1101 = vmatprep.subr.mxu0 0.0
        %1102 = vmatpush1.msra.mxu0 0.0
        %1103 = vmatprep.subr.mxu0 0.0
        %1104 = vmatpush1.msra.mxu0 0.0
        %1105 = vmatprep.subr.mxu0 0.0
        %1106 = vmatpush1.msra.mxu0 0.0
        %1107 = vmatprep.subr.mxu0 0.0
        %1108 = vmatpush1.msra.mxu0 0.0
        %1109 = vmatprep.subr.mxu0 0.0
        %1110 = vmatpush1.msra.mxu0 0.0
        %1111 = vmatprep.subr.mxu0 0.0
        %1112 = vmatpush1.msra.mxu0 0.0
        %1113 = vmatprep.subr.mxu0 0.0
        %1114 = vmatpush1.msra.mxu0 0.0
        %1115 = vmatprep.subr.mxu0 0.0
        %1116 = vmatpush1.msra.mxu0 0.0
        %1117 = vmatprep.subr.mxu0 0.0
        %1118 = vmatpush1.msra.mxu0 0.0
        %1119 = vmatprep.subr.mxu0 0.0
        %1120 = vmatpush1.msra.mxu0 0.0
        %1121 = vmatprep.subr.mxu0 0.0
        %1122 = vmatpush1.msra.mxu0 0.0
        %1123 = vmatprep.subr.mxu0 0.0
        %1124 = vmatpush1.msra.mxu0 0.0
        %1125 = vmatprep.subr.mxu0 0.0
        %1126 = vmatpush1.msra.mxu0 %v1076
        %1127 = vmatprep.subr.mxu0 0.0
        %1128 = vmatpush1.msra.mxu0 %v1075
        %1129 = vmatprep.subr.mxu0 0.0
        %1130 = vmatpush1.msra.mxu0 %v1074
        %1131 = vmatprep.subr.mxu0 0.0
        %1132 = vmatpush1.msra.mxu0 %v1073
        %1133 = vmatprep.subr.mxu0 0.0
        %1134 = vmatpush2.msra.mxu0 0.0
        %1135 = vmatprep.subr.mxu0 0.0
        %1136 = vmatpush2.msra.mxu0 0.0
        %1137 = vmatprep.subr.mxu0 0.0
        %1138 = vmatpush2.msra.mxu0 0.0
        %1139 = vmatprep.subr.mxu0 0.0
        %1140 = vmatpush2.msra.mxu0 0.0
        %1141 = vmatprep.subr.mxu0 0.0
        %1142 = vmatpush2.msra.mxu0 0.0
        %1143 = vmatprep.subr.mxu0 0.0
        %1144 = vmatpush2.msra.mxu0 0.0
        %1145 = vmatprep.subr.mxu0 0.0
        %1146 = vmatpush2.msra.mxu0 0.0
        %1147 = vmatprep.subr.mxu0 0.0
        %1148 = vmatpush2.msra.mxu0 0.0
        %1149 = vmatprep.subr.mxu0 0.0
        %1150 = vmatpush2.msra.mxu0 0.0
        %1151 = vmatprep.subr.mxu0 0.0
        %1152 = vmatpush2.msra.mxu0 0.0
        %1153 = vmatprep.subr.mxu0 0.0
        %1154 = vmatpush2.msra.mxu0 0.0
        %1155 = vmatprep.subr.mxu0 0.0
        %1156 = vmatpush2.msra.mxu0 0.0
        %1157 = vmatprep.subr.mxu0 0.0
        %1158 = vmatpush2.msra.mxu0 0.0
        %1159 = vmatprep.subr.mxu0 0.0
        %1160 = vmatpush2.msra.mxu0 0.0
        %1161 = vmatprep.subr.mxu0 0.0
        %1162 = vmatpush2.msra.mxu0 0.0
        %1163 = vmatprep.subr.mxu0 0.0
        %1164 = vmatpush2.msra.mxu0 0.0
        %1165 = vmatprep.mubr.f32.mxu0 0.0
        %1166 = vmatmul.mubr.f32.gmra.mxu0 %v1099
        %v1167 = vpop.f32.mrf.mxu0
        %v1168 = vadd.f32 %v1082, %v1167
        %v1169 = vpop.f32.mrf.mxu0
        %1170 = vdwg.mxu0
        %v1171 = vxor.u32 %v1168, 2147483648
        %v1172 = vmul.f32 %v1171, 1.442695
        %v1173 = vpow.pop %v1172
        %v1174 = vadd.f32 %v1173, 1.0
        %v1175 = vrcp.pop %v1174
        %v1176 = vmul.f32 1.0, %v1175
        %1177 = vst.msk [vmem:[%s476] sm:$0xff] %vm499, %v1176
        %v1178 = vadd.f32 %v494, %v1176
        %v1179 = vsel %vm499, %v1178, 0.0
        %1180 = vadd.xlane.f32.xlu0 %v1179
        %v1181 = vpop.xlane.xlu0 %1180
        %v1182 = vrcp.pop 32.0
        %v1183 = vmul.f32 %v1181, %v1182
        %v1184 = vsub.f32 %v1178, %v1183
        %v1185 = vmul.f32 %v1184, %v1184
        %v1186 = vsel %vm499, %v1185, 0.0
        %1187 = vadd.xlane.f32.xlu0 %v1186
        %v1188 = vpop.xlane.xlu0 %1187
        %v1189 = vmul.f32 %v1188, %v1182
        %v1190 = vadd.f32 %v1189, 1e-05
        %v1191 = vrsqrt.pop %v1190
        %v1192 = vmul.f32 %v1184, %v1191
        %v1193 = vld [vmem:[%s6] sm:$0x1]
        %v1195 = vlaneseq
        %v1196 = vshrl.u32 %v1195, 7
        %v1197 = vsub.s32 0, %v1196
        %v1198 = vrot.slane %v1193, %v1197
        %v1200 = vmul.f32 %v1192, %v1198
        %v1201 = vld [vmem:[%s7] sm:$0x1]
        %v1203 = vlaneseq
        %v1204 = vshrl.u32 %v1203, 7
        %v1205 = vsub.s32 0, %v1204
        %v1206 = vrot.slane %v1201, %v1205
        %v1208 = vadd.f32 %v1200, %v1206
        %v1209 = vld [vmem:[#allocation5] sm:$0xff]
        %v1210 = vld [vmem:[#allocation5 + $0x8] sm:$0xff]
        %v1211 = vld [vmem:[#allocation5 + $0x10] sm:$0xff]
        %v1212 = vld [vmem:[#allocation5 + $0x18] sm:$0xff]
        %v1213 = vld [vmem:[%s9] sm:$0x1]
        %v1215 = vlaneseq
        %v1216 = vshrl.u32 %v1215, 7
        %v1217 = vsub.s32 0, %v1216
        %v1218 = vrot.slane %v1213, %v1217
        %v1221 = vsel %vm499, %v1208, 0
        %1223 = vmatprep.subr.mxu0 0.0
        %1224 = vmatpush1.msra.mxu0 0.0
        %1225 = vmatprep.subr.mxu0 0.0
        %1226 = vmatpush1.msra.mxu0 0.0
        %1227 = vmatprep.subr.mxu0 0.0
        %1228 = vmatpush1.msra.mxu0 0.0
        %1229 = vmatprep.subr.mxu0 0.0
        %1230 = vmatpush1.msra.mxu0 0.0
        %1231 = vmatprep.subr.mxu0 0.0
        %1232 = vmatpush1.msra.mxu0 0.0
        %1233 = vmatprep.subr.mxu0 0.0
        %1234 = vmatpush1.msra.mxu0 0.0
        %1235 = vmatprep.subr.mxu0 0.0
        %1236 = vmatpush1.msra.mxu0 0.0
        %1237 = vmatprep.subr.mxu0 0.0
        %1238 = vmatpush1.msra.mxu0 0.0
        %1239 = vmatprep.subr.mxu0 0.0
        %1240 = vmatpush1.msra.mxu0 0.0
        %1241 = vmatprep.subr.mxu0 0.0
        %1242 = vmatpush1.msra.mxu0 0.0
        %1243 = vmatprep.subr.mxu0 0.0
        %1244 = vmatpush1.msra.mxu0 0.0
        %1245 = vmatprep.subr.mxu0 0.0
        %1246 = vmatpush1.msra.mxu0 0.0
        %1247 = vmatprep.subr.mxu0 0.0
        %1248 = vmatpush1.msra.mxu0 %v1212
        %1249 = vmatprep.subr.mxu0 0.0
        %1250 = vmatpush1.msra.mxu0 %v1211
        %1251 = vmatprep.subr.mxu0 0.0
        %1252 = vmatpush1.msra.mxu0 %v1210
        %1253 = vmatprep.subr.mxu0 0.0
        %1254 = vmatpush1.msra.mxu0 %v1209
        %1255 = vmatprep.subr.mxu0 0.0
        %1256 = vmatpush2.msra.mxu0 0.0
        %1257 = vmatprep.subr.mxu0 0.0
        %1258 = vmatpush2.msra.mxu0 0.0
        %1259 = vmatprep.subr.mxu0 0.0
        %1260 = vmatpush2.msra.mxu0 0.0
        %1261 = vmatprep.subr.mxu0 0.0
        %1262 = vmatpush2.msra.mxu0 0.0
        %1263 = vmatprep.subr.mxu0 0.0
        %1264 = vmatpush2.msra.mxu0 0.0
        %1265 = vmatprep.subr.mxu0 0.0
        %1266 = vmatpush2.msra.mxu0 0.0
        %1267 = vmatprep.subr.mxu0 0.0
        %1268 = vmatpush2.msra.mxu0 0.0
        %1269 = vmatprep.subr.mxu0 0.0
        %1270 = vmatpush2.msra.mxu0 0.0
        %1271 = vmatprep.subr.mxu0 0.0
        %1272 = vmatpush2.msra.mxu0 0.0
        %1273 = vmatprep.subr.mxu0 0.0
        %1274 = vmatpush2.msra.mxu0 0.0
        %1275 = vmatprep.subr.mxu0 0.0
        %1276 = vmatpush2.msra.mxu0 0.0
        %1277 = vmatprep.subr.mxu0 0.0
        %1278 = vmatpush2.msra.mxu0 0.0
        %1279 = vmatprep.subr.mxu0 0.0
        %1280 = vmatpush2.msra.mxu0 0.0
        %1281 = vmatprep.subr.mxu0 0.0
        %1282 = vmatpush2.msra.mxu0 0.0
        %1283 = vmatprep.subr.mxu0 0.0
        %1284 = vmatpush2.msra.mxu0 0.0
        %1285 = vmatprep.subr.mxu0 0.0
        %1286 = vmatpush2.msra.mxu0 0.0
        %1287 = vmatprep.mubr.f32.mxu0 0.0
        %1288 = vmatmul.mubr.f32.gmra.mxu0 %v1221
        %v1289 = vpop.f32.mrf.mxu0
        %v1290 = vadd.f32 %v1218, %v1289
        %v1291 = vpop.f32.mrf.mxu0
        %1292 = vdwg.mxu0
        %1293 = vst.msk [vmem:[%s463] sm:$0xff] %vm499, %v1290
        %s1294 = sand.u32 %s262, 1
        %s1295 = scalar_lea.sflag [#allocation4], %s1294
        %s1296 = sand.u32 %s262, 1
        %s1297 = smul.addr %s1296, 8
        %s1298 = scalar_lea.vmem [#allocation7], %s1297
        %p1299 = scmp.lt.s32.totalorder %s34, 1
        %s1300 = scalar_select %p1299, %s34, 1
        %s1301 = smul.addr %s1300, 8
        %s1302 = scalar_lea.vmem %s11, %s1301
        %s1303 = sand.u32 %s314, 1
        %s1304 = scalar_lea.sflag [#allocation9], %s1303
        %s1305 = sand.u32 %s314, 1
        %s1306 = smul.addr %s1305, 8
        %s1307 = scalar_lea.vmem [#allocation8], %s1306
        // Predicated region
        $region69: #{tpu_custom_call.1} parent=59 // pred_check
          %p1308 = pneg %p272
        $region70: #{tpu_custom_call.1} parent=59 // pred_check_branch
          %1310 = sbr.rel (%p1308) target = $region72
        $region71: #{tpu_custom_call.1} parent=59 // pred_region
          %s1312 = ssub.s32 128, 128
          %1313 = vsyncadd %s1295, %s1312
          %s1314 = smul.addr %s34, 128
          %s1315 = scalar_lea.hbm %s10, %s1314
          %s1317 = sshll.u32 %s1298, 4
          %s1318 = int_to_ptr.vmem [resolvable:$true] %s1317
          %1320 = dma.vmem_to_hbm [thread:$0]  %s1318, 128, %s1315, %s1295
        $region72: #{tpu_custom_call.1} parent=59 // pred_fallthru
          _
        // Predicated region
        $region73: #{tpu_custom_call.1} parent=59 // pred_check
          %p1321 = pneg %p298
        $region74: #{tpu_custom_call.1} parent=59 // pred_check_branch
          %1323 = sbr.rel (%p1321) target = $region76
        $region75: #{tpu_custom_call.1} parent=59 // pred_region
          _
        $region76: #{tpu_custom_call.1} parent=59 // pred_fallthru
          _
        // Predicated region
        $region77: #{tpu_custom_call.1} parent=59 // pred_check
          %p1324 = pneg %p324
        $region78: #{tpu_custom_call.1} parent=59 // pred_check_branch
          %1326 = sbr.rel (%p1324) target = $region80
        $region79: #{tpu_custom_call.1} parent=59 // pred_region
          %s1328 = ssub.s32 128, 128
          %1329 = vsyncadd %s1304, %s1328
          %s1330 = smul.addr %s34, 128
          %s1331 = scalar_lea.hbm %s12, %s1330
          %s1333 = sshll.u32 %s1307, 4
          %s1334 = int_to_ptr.vmem [resolvable:$true] %s1333
          %1336 = dma.vmem_to_hbm [thread:$0]  %s1334, 128, %s1331, %s1304
        $region80: #{tpu_custom_call.1} parent=59 // pred_fallthru
          _
      $region60: #{tpu_custom_call.1} parent=5 // pred_fallthru
        _
      %p1337 = scmp.le.s32.totalorder 2, %s29
      // Predicated region
      $region81: #{tpu_custom_call.1} parent=5 // pred_check
        %p1338 = pneg %p1337
      $region82: #{tpu_custom_call.1} parent=5 // pred_check_branch
        %1340 = sbr.rel (%p1338) target = $region84
      $region83: #{tpu_custom_call.1} parent=5 // pred_region
        %s1341 = ssub.s32 %s29, 2
        // Predicated region
        $region85: #{tpu_custom_call.1} parent=83 // pred_check
          %p1342 = pneg %p278
        $region86: #{tpu_custom_call.1} parent=83 // pred_check_branch
          %1344 = sbr.rel (%p1342) target = $region88
        $region87: #{tpu_custom_call.1} parent=83 // pred_region
          %s1345 = sand.u32 %s263, 1
          %s1346 = scalar_lea.sflag [#allocation4], %s1345
          %s1347 = sand.u32 %s263, 1
          %s1348 = smul.addr %s1347, 8
          %s1349 = scalar_lea.vmem [#allocation7], %s1348
          %1350 = dma.done %s1346, 128
        $region88: #{tpu_custom_call.1} parent=83 // pred_fallthru
          _
        // Predicated region
        $region89: #{tpu_custom_call.1} parent=83 // pred_check
          %p1351 = pneg %p304
        $region90: #{tpu_custom_call.1} parent=83 // pred_check_branch
          %1353 = sbr.rel (%p1351) target = $region92
        $region91: #{tpu_custom_call.1} parent=83 // pred_region
          %p1354 = scmp.lt.s32.totalorder %s35, 1
          %s1355 = scalar_select %p1354, %s35, 1
          %s1356 = smul.addr %s1355, 8
          %s1357 = scalar_lea.vmem %s11, %s1356
        $region92: #{tpu_custom_call.1} parent=83 // pred_fallthru
          _
        // Predicated region
        $region93: #{tpu_custom_call.1} parent=83 // pred_check
          %p1358 = pneg %p330
        $region94: #{tpu_custom_call.1} parent=83 // pred_check_branch
          %1360 = sbr.rel (%p1358) target = $region96
        $region95: #{tpu_custom_call.1} parent=83 // pred_region
          %s1361 = sand.u32 %s315, 1
          %s1362 = scalar_lea.sflag [#allocation9], %s1361
          %s1363 = sand.u32 %s315, 1
          %s1364 = smul.addr %s1363, 8
          %s1365 = scalar_lea.vmem [#allocation8], %s1364
          %1366 = dma.done %s1362, 128
        $region96: #{tpu_custom_call.1} parent=83 // pred_fallthru
          _
      $region84: #{tpu_custom_call.1} parent=5 // pred_fallthru
        _
    $region6: #{tpu_custom_call.1} parent=1 // loop_footer
      %s33 = sadd.s32 1, %s29
    $region7: #{tpu_custom_call.1} parent=1 // loop_footer_branch
      %28 = sbr.rel target = $region3
    $region8: #{tpu_custom_call.1} parent=1 // loop_exit
      _
    %1367 = vsyncpa [#allocation3], 1
    %s1368 = scalar_lea.sflag [#allocation3], 1
    %1369 = vsyncpa %s1368, 1
    %1370 = vsyncpa [#allocation6], 1
    %1371 = vsyncpa [#allocation4], 1
    %s1372 = scalar_lea.sflag [#allocation4], 1
    %1373 = vsyncpa %s1372, 1
    %1374 = vsyncpa [#allocation9], 1
    %s1375 = scalar_lea.sflag [#allocation9], 1
    %1376 = vsyncpa %s1375, 1

</llo_original>
